<compile_context>
chip_gen: v5e
topology: v5e:2x2
jax: 0.10.0
libtpu: 0.0.40
codegen_flags: <defaults>
</compile_context>

<pallas_src>
import functools
import math

import jax
import jax.numpy as jnp
from jax import lax
from jax.experimental import pallas as pl
from jax.experimental.pallas import tpu as pltpu


def _round_up(x, m):
    return (x + m - 1) // m * m


def _cdiv(a, b):
    return -(-a // b)


def _phase_tables(K, s, p):
    """Phase decomposition tables for one spatial dim of a transposed conv.

    For output phase r in [0, s): the (uniform, zero-padded) flipped sub-kernel
    tap indices into the original kernel, and the (pre-padding) input offset.
    """
    T = _cdiv(K, s)                      # ceil(K/s): uniform tap count per phase
    taps, starts = [], []
    for r in range(s):
        m0 = (r + p) % s
        e = (r + p) // s
        taps.append([m0 + (T - 1 - u) * s for u in range(T)])   # >= K -> zero tap
        starts.append(e - T + 1)
    return T, taps, starts


def _choose_mh(OQh, OQwp, PH, Coutp, max_tile_rows,
               vmem_budget_bytes=16 * 1024 * 1024):
    """Phase-rows per grid step: the biggest row tile whose double-buffered
    per-step blocks (bf16 y in/out + f32 depth-to-space out) fit the VMEM
    budget.  Bigger tiles amortize the ~0.35us/step grid overhead and get
    closer to the HBM roofline.  The 16 MiB default stays inside every
    generation's scoped-VMEM default (v5e 16 MiB, v6e/v7x 32 MiB); raise it
    together with vmem_limit_bytes on v5e/v6e (128 MiB physical) for larger
    tiles."""
    mh = max(1, min(OQh, max(1, max_tile_rows // OQwp)))
    # worst per-step bytes (kernel 2): 2x bf16 y block + 2x f32 d2s block
    per_row = PH * OQwp * Coutp * (2 * 2 + 2 * 4)
    while mh > 1 and mh * per_row > vmem_budget_bytes:
        mh -= 1
    return mh


def _convt_stats_kernel(x_ref, w_ref, b_ref, y_ref, stats_ref, *,
                        phases, Mh, OQwp, Th, TwCinp):
    """One (batch, row-tile) step: every output phase of ConvTranspose2d + bias,
    plus per-tile BatchNorm partial statistics as a fused epilogue.

    x_ref     : (1, sw, Hp, OQwp, Tw*Cinp)  bf16  W-gathered padded input (full H)
    w_ref     : (PH, Th, Tw*Cinp, Coutp)    bf16  per-phase flipped sub-kernels
    b_ref     : (1, Coutp)                  f32   conv bias (channel-padded)
    y_ref     : (1, PH, Mh*OQwp, Coutp)     bf16  conv+bias output, phase-major
    stats_ref : (1, 1, 2, Coutp)            f32   [sum, sum_sq] over valid positions
    """
    t = pl.program_id(1)
    Coutp = y_ref.shape[-1]
    Mtile = Mh * OQwp
    bias = b_ref[...]                                       # hoisted (1, Coutp)

    # Row / col ids hoisted out of the unrolled phase loop (review #9).
    need_mask = any(not full for (_, _, _, _, full) in phases)
    if need_mask:
        rid = lax.broadcasted_iota(jnp.int32, (Mtile, 1), 0)
        qh = rid // OQwp + t * Mh                           # global phase-row
        qw = rid % OQwp                                     # phase-col

    s1 = jnp.zeros((1, Coutp), jnp.float32)
    s2 = jnp.zeros((1, Coutp), jnp.float32)

    for ph, (rw, r0h, vr, vc, full) in enumerate(phases):   # static unroll, PH=sh*sw
        # ceil(Kh/sh) accumulated MXU matmuls, contraction depth Tw*Cinp each;
        # the W-axis taps were gathered lane-contiguously in the wrapper, so
        # operands come straight from the x block (no patch scratch).
        acc = jnp.zeros((Mtile, Coutp), jnp.float32)
        for th in range(Th):
            xs = x_ref[0, rw, pl.ds(t * Mh + r0h + th, Mh), :, :]
            acc = acc + jnp.dot(xs.reshape(Mtile, TwCinp), w_ref[ph, th, :, :],
                                preferred_element_type=jnp.float32)
        y = acc + bias                                      # f32 (Mtile, Coutp)
        y_ref[0, ph, :, :] = y.astype(y_ref.dtype)          # bf16 store (review #2)

        # BatchNorm partial statistics over valid output positions only.
        if full:
            ym = y
        else:
            m = ((qh < vr) & (qw < vc)).astype(jnp.float32)
            ym = y * m
        s1 = s1 + jnp.sum(ym, axis=0, keepdims=True)
        s2 = s2 + jnp.sum(ym * y, axis=0, keepdims=True)

    stats_ref[0, 0, 0:1, :] = s1                            # two row stores,
    stats_ref[0, 0, 1:2, :] = s2                            # no concat (review #9)


def _bn_relu_d2s_kernel(y_ref, scale_ref, shift_ref, o_ref, *,
                        phase_rc, Mh, OQwp):
    """BatchNorm normalize (precomputed scale/shift) + ReLU with the
    depth-to-space (phase -> spatial) interleave fused into the output layout.

    y_ref : (1, PH, Mh*OQwp, Coutp)       bf16
    o_ref : (1, Mh, sh, OQwp, sw*Coutp)   f32   (padded NHWC rows of this tile)
    """
    Coutp = y_ref.shape[-1]
    scale = scale_ref[...]                                  # hoisted (1, Coutp)
    shift = shift_ref[...]
    for ph, (rh, rw) in enumerate(phase_rc):                # static unroll
        y = y_ref[0, ph, :, :].astype(jnp.float32)
        z = jnp.maximum(y * scale + shift, 0.0)
        # lane offset rw*Coutp is 128-aligned -> unmasked full-lane stores
        o_ref[0, :, rh, :, rw * Coutp:(rw + 1) * Coutp] = z.reshape(Mh, OQwp, Coutp)


def conv2d_transpose_bn_relu(x_nchw, weight, bias, gamma, beta,
                             stride, padding, output_padding=0, eps=1e-5,
                             max_tile_rows=512, vmem_limit_bytes=None):
    """Forward of the PyTorch Conv2dTranspose module.

    x_nchw : (N, Cin, H, W) f32
    weight : (Cin, Cout, K, K)   (PyTorch ConvTranspose2d layout)
    bias, gamma, beta : (Cout,)
    Returns (N, Cout, OH, OW) f32.
    """
    N, Cin, H, W = x_nchw.shape
    Cin_w, Cout, Kh, Kw = weight.shape
    assert Cin == Cin_w
    sh = sw = int(stride)
    p_h = p_w = int(padding)
    op = int(output_padding)
    assert 0 <= op < sh, "phase decomposition assumes output_padding < stride"
    OH = (H - 1) * sh - 2 * p_h + Kh + op
    OW = (W - 1) * sw - 2 * p_w + Kw + op

    # ---- phase-decomposition tables (separable per spatial dim) ----
    Th, mh_tab, sth = _phase_tables(Kh, sh, p_h)
    Tw, mw_tab, stw = _phase_tables(Kw, sw, p_w)
    OQh, OQw = _cdiv(OH, sh), _cdiv(OW, sw)
    PH = sh * sw

    # padded channel / width counts: lane-dense Cout, sublane-friendly rest
    Cinp = _round_up(Cin, 8)
    Coutp = _round_up(Cout, 128)
    TwCinp = Tw * Cinp
    OQwp = _round_up(OQw, 8)

    # ---- row-tile size for the second grid axis (review #1) ----
    Mh = _choose_mh(OQh, OQwp, PH, Coutp, max_tile_rows)
    T = _cdiv(OQh, Mh)
    OQhp = T * Mh
    Mtile = Mh * OQwp
    Mpad = T * Mtile

    # input spatial padding so every (phase, tap, padded row/col) read is in range
    Lh = max([0] + [-v for v in sth])
    Rh = max([0] + [v + Th - 1 + OQhp - H for v in sth])
    Lw = max([0] + [-v for v in stw])
    Rw = max([0] + [v + Tw - 1 + OQwp - W for v in stw])
    Hp = H + Lh + Rh

    # ---- W-axis tap gather in XLA on the small input side (review #6):
    #      x_wide[n, rw, h, qw, tw*Cinp + c] = x_pad[n, h, stw[rw]+Lw+tw+qw, c]
    x_nhwc = jnp.transpose(x_nchw, (0, 2, 3, 1)).astype(jnp.float32)
    x_pad = jnp.pad(x_nhwc, ((0, 0), (Lh, Rh), (Lw, Rw),
                             (0, Cinp - Cin))).astype(jnp.bfloat16)
    parts = []
    for rw in range(sw):
        c0 = stw[rw] + Lw
        taps_w = [x_pad[:, :, c0 + tw:c0 + tw + OQwp, :] for tw in range(Tw)]
        parts.append(jnp.concatenate(taps_w, axis=-1))      # (N, Hp, OQwp, Tw*Cinp)
    x_wide = jnp.stack(parts, axis=1)                       # (N, sw, Hp, OQwp, Tw*Cinp)

    # ---- per-phase flipped / stride-subsampled weights: (PH, Th, Tw*Cinp, Coutp) ----
    # TODO(synk): for production Cin/Cout check MXU utilization (depth Tw*Cin,
    # columns Coutp); for genuinely tiny channels merge batch elements along M
    # instead of padding channels deeper (review #7).
    w_f32 = weight.astype(jnp.float32)
    w_packed = jnp.zeros((PH, Th, TwCinp, Coutp), jnp.float32)
    for rh in range(sh):
        for rw in range(sw):
            phase = rh * sw + rw
            for th in range(Th):
                mh_k = mh_tab[rh][th]
                if mh_k >= Kh:
                    continue
                for tw in range(Tw):
                    mw_k = mw_tab[rw][tw]
                    if mw_k >= Kw:
                        continue
                    c0 = tw * Cinp
                    w_packed = w_packed.at[phase, th, c0:c0 + Cin, :Cout].set(
                        w_f32[:, :, mh_k, mw_k])
    w_packed = w_packed.astype(jnp.bfloat16)

    b_pad = jnp.zeros((1, Coutp), jnp.float32).at[0, :Cout].set(
        bias.astype(jnp.float32))

    # per-phase static metadata (Python constants)
    phases, phase_rc = [], []
    for rh in range(sh):
        for rw in range(sw):
            vr = max(0, _cdiv(OH - rh, sh))                 # valid phase-rows
            vc = max(0, _cdiv(OW - rw, sw))                 # valid phase-cols
            full = (vr == OQhp) and (vc == OQwp)
            phases.append((rw, sth[rh] + Lh, vr, vc, full))
            phase_rc.append((rh, rw))

    kernel1 = functools.partial(_convt_stats_kernel, phases=tuple(phases),
                                Mh=Mh, OQwp=OQwp, Th=Th, TwCinp=TwCinp)

    # TODO(synk): mark the grid-invariant weight/bias/scale/shift specs with
    # pipeline_mode=pl.Buffered(1) (single buffer) once validated on the target
    # jax version -- reclaims MiB-scale VMEM inside v7x's 64 MiB budget.
    y_conv, stats = pl.pallas_call(
        kernel1,
        grid=(N, T),
        in_specs=[
            pl.BlockSpec((1, sw, Hp, OQwp, TwCinp), lambda n, t: (n, 0, 0, 0, 0)),
            pl.BlockSpec((PH, Th, TwCinp, Coutp), lambda n, t: (0, 0, 0, 0)),
            pl.BlockSpec((1, Coutp), lambda n, t: (0, 0)),
        ],
        out_specs=[
            pl.BlockSpec((1, PH, Mtile, Coutp), lambda n, t: (n, 0, t, 0)),
            pl.BlockSpec((1, 1, 2, Coutp), lambda n, t: (n, t, 0, 0)),
        ],
        out_shape=[
            jax.ShapeDtypeStruct((N, PH, Mpad, Coutp), jnp.bfloat16),
            jax.ShapeDtypeStruct((N, T, 2, Coutp), jnp.float32),
        ],
        compiler_params=pltpu.CompilerParams(
            dimension_semantics=("parallel", "parallel"),
            vmem_limit_bytes=vmem_limit_bytes),
    )(x_wide, w_packed, b_pad)

    # ---- batch statistics -> BN scale / shift (tiny per-channel math) ----
    cnt = jnp.float32(N * OH * OW)
    tot = jnp.sum(stats, axis=(0, 1))                       # (2, Coutp)
    mean = tot[0] / cnt
    var = jnp.maximum(tot[1] / cnt - mean * mean, 0.0)      # biased (training) variance
    g_pad = jnp.zeros((Coutp,), jnp.float32).at[:Cout].set(gamma.astype(jnp.float32))
    bt_pad = jnp.zeros((Coutp,), jnp.float32).at[:Cout].set(beta.astype(jnp.float32))
    scale = (g_pad * lax.rsqrt(var + eps)).reshape(1, Coutp)
    shift = (bt_pad - mean * scale[0]).reshape(1, Coutp)

    kernel2 = functools.partial(_bn_relu_d2s_kernel, phase_rc=tuple(phase_rc),
                                Mh=Mh, OQwp=OQwp)

    out_d2s = pl.pallas_call(
        kernel2,
        grid=(N, T),
        in_specs=[
            pl.BlockSpec((1, PH, Mtile, Coutp), lambda n, t: (n, 0, t, 0)),
            pl.BlockSpec((1, Coutp), lambda n, t: (0, 0)),
            pl.BlockSpec((1, Coutp), lambda n, t: (0, 0)),
        ],
        out_specs=pl.BlockSpec((1, Mh, sh, OQwp, sw * Coutp),
                               lambda n, t: (n, t, 0, 0, 0)),
        out_shape=jax.ShapeDtypeStruct((N, OQhp, sh, OQwp, sw * Coutp), jnp.float32),
        compiler_params=pltpu.CompilerParams(
            dimension_semantics=("parallel", "parallel"),
            vmem_limit_bytes=vmem_limit_bytes),
    )(y_conv, scale, shift)

    # out_d2s is already padded NHWC after a free reshape:
    #   (n, qh, rh, qw, rw*Coutp + c)  ->  (n, qh*sh + rh, qw*sw + rw, c)
    out_nhwc = out_d2s.reshape(N, OQhp * sh, OQwp * sw, Coutp)
    # only the final NHWC->NCHW transpose remains as XLA glue (review #3);
    # return out_nhwc[:, :OH, :OW, :Cout] directly if the consumer accepts NHWC.
    return jnp.transpose(out_nhwc[:, :OH, :OW, :Cout], (0, 3, 1, 2))


def _reference(x_nchw, weight, bias, gamma, beta, stride, padding,
               output_padding=0, eps=1e-5):
    """Pure-JAX f32 reference: dilated-input flipped-kernel conv + BN + ReLU."""
    N, Cin, H, W = x_nchw.shape
    _, Cout, K, _ = weight.shape
    s, p, op = stride, padding, output_padding
    x = jnp.transpose(x_nchw, (0, 2, 3, 1))                             # NHWC
    w_hwio = jnp.transpose(weight[:, :, ::-1, ::-1], (2, 3, 0, 1))      # (K,K,Cin,Cout)
    conv = lax.conv_general_dilated(
        x, w_hwio, window_strides=(1, 1),
        padding=[(K - 1 - p, K - 1 - p + op)] * 2,
        lhs_dilation=(s, s),
        dimension_numbers=("NHWC", "HWIO", "NHWC"))
    conv = conv + bias.reshape(1, 1, 1, Cout)
    mean = jnp.mean(conv, axis=(0, 1, 2))
    var = jnp.mean((conv - mean) ** 2, axis=(0, 1, 2))
    out = (conv - mean) * lax.rsqrt(var + eps) * gamma + beta
    out = jnp.maximum(out, 0.0)
    return jnp.transpose(out, (0, 3, 1, 2))


if __name__ == "__main__":
    key = jax.random.PRNGKey(0)
    kx, kw, kb, kg, kbt = jax.random.split(key, 5)

    # Module hyper-params (cin, cout, kernel_size, stride, padding, output_padding)
    N, Cin, H, W = 2, 4, 16, 16
    Cout, K = 8, 4

    x = jax.random.normal(kx, (N, Cin, H, W), jnp.float32)
    fan_in = Cout * K * K
    bound = 1.0 / math.sqrt(fan_in)
    weight = jax.random.uniform(kw, (Cin, Cout, K, K), jnp.float32, -bound, bound)
    bias = jax.random.uniform(kb, (Cout,), jnp.float32, -bound, bound)
    gamma = jax.random.uniform(kg, (Cout,), jnp.float32, 0.5, 1.5)
    beta = 0.1 * jax.random.normal(kbt, (Cout,), jnp.float32)

    # (stride, padding, output_padding, max_tile_rows).  max_tile_rows=128 forces
    # a multi-row-tile grid at these toy sizes; the second config additionally
    # exercises partially-valid phases and OQ padding (masked BN statistics).
    configs = [(2, 1, 0, 128), (2, 1, 1, 128)]
    for stride, padding, output_padding, mtr in configs:
        out = conv2d_transpose_bn_relu(x, weight, bias, gamma, beta,
                                       stride, padding, output_padding,
                                       max_tile_rows=mtr)
        out = jax.block_until_ready(out)

        OH = (H - 1) * stride - 2 * padding + K + output_padding
        OW = (W - 1) * stride - 2 * padding + K + output_padding
        assert out.shape == (N, Cout, OH, OW)
        assert bool(jnp.all(out >= 0.0))                 # ReLU
        assert bool(jnp.all(jnp.isfinite(out)))

        ref = _reference(x, weight, bias, gamma, beta, stride, padding,
                         output_padding)
        max_err = float(jnp.max(jnp.abs(out - ref)))
        assert max_err < 5e-2, f"max abs error vs reference: {max_err}"

    print("KERNEL_OK")
</pallas_src>

<mosaic_0001>
module attributes {stable_mosaic.version = 11 : i64} {
  func.func @_convt_stats_kernel(%arg0: i32, %arg1: i32, %arg2: memref<1x2x18x16x16xbf16, #tpu.memory_space<vmem>>, %arg3: memref<4x2x16x128xbf16, #tpu.memory_space<vmem>>, %arg4: memref<1x128xf32, #tpu.memory_space<vmem>>, %arg5: memref<1x4x128x128xbf16, #tpu.memory_space<vmem>>, %arg6: memref<1x1x2x128xf32, #tpu.memory_space<vmem>>) attributes {dimension_semantics = [#tpu.dimension_semantics<parallel>, #tpu.dimension_semantics<parallel>], iteration_bounds = array<i64: 2, 2>, scalar_prefetch = 0 : i64, scratch_operands = 0 : i64, tpu.core_type = #tpu.core_type<tc>, window_params = [{transform_indices = @transform_0, window_bounds = array<i64: 1, 2, 18, 16, 16>}, {pipeline_mode = #tpu.pipeline_mode<synchronous>, transform_indices = @transform_1, window_bounds = array<i64: 4, 2, 16, 128>}, {pipeline_mode = #tpu.pipeline_mode<synchronous>, transform_indices = @transform_2, window_bounds = array<i64: 1, 128>}, {transform_indices = @transform_3, window_bounds = array<i64: 1, 4, 128, 128>}, {transform_indices = @transform_4, window_bounds = array<i64: 1, 1, 2, 128>}]} {
    %c0 = arith.constant 0 : index
    %c0_0 = arith.constant 0 : index
    %0 = vector.load %arg4[%c0, %c0_0] : memref<1x128xf32, #tpu.memory_space<vmem>>, vector<1x128xf32>
    %cst = arith.constant 0.000000e+00 : f32
    %1 = vector.broadcast %cst : f32 to vector<1x128xf32>
    %cst_1 = arith.constant 0.000000e+00 : f32
    %2 = vector.broadcast %cst_1 : f32 to vector<1x128xf32>
    %cst_2 = arith.constant 0.000000e+00 : f32
    %3 = vector.broadcast %cst_2 : f32 to vector<128x128xf32>
    %c8_i32 = arith.constant 8 : i32
    %4 = arith.muli %arg1, %c8_i32 : i32
    %c0_i32 = arith.constant 0 : i32
    %5 = arith.addi %4, %c0_i32 : i32
    %c0_i32_3 = arith.constant 0 : i32
    %6 = arith.addi %5, %c0_i32_3 : i32
    %c0_4 = arith.constant 0 : index
    %c0_5 = arith.constant 0 : index
    %7 = arith.index_cast %6 : i32 to index
    %c0_6 = arith.constant 0 : index
    %c0_7 = arith.constant 0 : index
    %8 = vector.load %arg2[%c0_4, %c0_5, %7, %c0_6, %c0_7] : memref<1x2x18x16x16xbf16, #tpu.memory_space<vmem>>, vector<1x1x8x16x16xbf16>
    %9 = vector.shape_cast %8 : vector<1x1x8x16x16xbf16> to vector<8x16x16xbf16>
    %10 = vector.shape_cast %9 : vector<8x16x16xbf16> to vector<128x16xbf16>
    %c0_8 = arith.constant 0 : index
    %c0_9 = arith.constant 0 : index
    %c0_10 = arith.constant 0 : index
    %c0_11 = arith.constant 0 : index
    %11 = vector.load %arg3[%c0_8, %c0_9, %c0_10, %c0_11] : memref<4x2x16x128xbf16, #tpu.memory_space<vmem>>, vector<1x1x16x128xbf16>
    %12 = vector.shape_cast %11 : vector<1x1x16x128xbf16> to vector<16x128xbf16>
    %cst_12 = arith.constant dense<0.000000e+00> : vector<128x128xf32>
    %13 = tpu.matmul %10, %12, %cst_12 {dimension_numbers = #tpu.dot_dimension_numbers<[1], [0], [0], [1], [0, 0, 1, 1], [], []>} : vector<128x16xbf16>, vector<16x128xbf16>, vector<128x128xf32> -> vector<128x128xf32>
    %14 = arith.addf %3, %13 : vector<128x128xf32>
    %c8_i32_13 = arith.constant 8 : i32
    %15 = arith.muli %arg1, %c8_i32_13 : i32
    %c0_i32_14 = arith.constant 0 : i32
    %16 = arith.addi %15, %c0_i32_14 : i32
    %c1_i32 = arith.constant 1 : i32
    %17 = arith.addi %16, %c1_i32 : i32
    %c0_15 = arith.constant 0 : index
    %c0_16 = arith.constant 0 : index
    %18 = arith.index_cast %17 : i32 to index
    %c0_17 = arith.constant 0 : index
    %c0_18 = arith.constant 0 : index
    %19 = vector.load %arg2[%c0_15, %c0_16, %18, %c0_17, %c0_18] : memref<1x2x18x16x16xbf16, #tpu.memory_space<vmem>>, vector<1x1x8x16x16xbf16>
    %20 = vector.shape_cast %19 : vector<1x1x8x16x16xbf16> to vector<8x16x16xbf16>
    %21 = vector.shape_cast %20 : vector<8x16x16xbf16> to vector<128x16xbf16>
    %c0_19 = arith.constant 0 : index
    %c1 = arith.constant 1 : index
    %c0_20 = arith.constant 0 : index
    %c0_21 = arith.constant 0 : index
    %22 = vector.load %arg3[%c0_19, %c1, %c0_20, %c0_21] : memref<4x2x16x128xbf16, #tpu.memory_space<vmem>>, vector<1x1x16x128xbf16>
    %23 = vector.shape_cast %22 : vector<1x1x16x128xbf16> to vector<16x128xbf16>
    %cst_22 = arith.constant dense<0.000000e+00> : vector<128x128xf32>
    %24 = tpu.matmul %21, %23, %cst_22 {dimension_numbers = #tpu.dot_dimension_numbers<[1], [0], [0], [1], [0, 0, 1, 1], [], []>} : vector<128x16xbf16>, vector<16x128xbf16>, vector<128x128xf32> -> vector<128x128xf32>
    %25 = arith.addf %14, %24 : vector<128x128xf32>
    %26 = vector.broadcast %0 : vector<1x128xf32> to vector<128x128xf32>
    %27 = arith.addf %25, %26 : vector<128x128xf32>
    %28 = arith.truncf %27 : vector<128x128xf32> to vector<128x128xbf16>
    %c0_23 = arith.constant 0 : index
    %c0_24 = arith.constant 0 : index
    %c0_25 = arith.constant 0 : index
    %c0_26 = arith.constant 0 : index
    %29 = vector.load %arg5[%c0_23, %c0_24, %c0_25, %c0_26] : memref<1x4x128x128xbf16, #tpu.memory_space<vmem>>, vector<1x1x128x128xbf16>
    %30 = vector.shape_cast %29 : vector<1x1x128x128xbf16> to vector<128x128xbf16>
    %31 = vector.shape_cast %28 : vector<128x128xbf16> to vector<1x1x128x128xbf16>
    tpu.vector_store %arg5[%c0_23, %c0_24, %c0_25, %c0_26], %31 {strides = array<i32>} : memref<1x4x128x128xbf16, #tpu.memory_space<vmem>>, vector<1x1x128x128xbf16>,
    %cst_27 = arith.constant dense<0.000000e+00> : vector<128xf32>
    %32 = vector.multi_reduction <add>, %27, %cst_27 [0] : vector<128x128xf32> to vector<128xf32>
    %33 = vector.shape_cast %32 : vector<128xf32> to vector<1x128xf32>
    %34 = arith.addf %1, %33 : vector<1x128xf32>
    %35 = arith.mulf %27, %27 : vector<128x128xf32>
    %cst_28 = arith.constant dense<0.000000e+00> : vector<128xf32>
    %36 = vector.multi_reduction <add>, %35, %cst_28 [0] : vector<128x128xf32> to vector<128xf32>
    %37 = vector.shape_cast %36 : vector<128xf32> to vector<1x128xf32>
    %38 = arith.addf %2, %37 : vector<1x128xf32>
    %cst_29 = arith.constant 0.000000e+00 : f32
    %39 = vector.broadcast %cst_29 : f32 to vector<128x128xf32>
    %c8_i32_30 = arith.constant 8 : i32
    %40 = arith.muli %arg1, %c8_i32_30 : i32
    %c0_i32_31 = arith.constant 0 : i32
    %41 = arith.addi %40, %c0_i32_31 : i32
    %c0_i32_32 = arith.constant 0 : i32
    %42 = arith.addi %41, %c0_i32_32 : i32
    %c0_33 = arith.constant 0 : index
    %c1_34 = arith.constant 1 : index
    %43 = arith.index_cast %42 : i32 to index
    %c0_35 = arith.constant 0 : index
    %c0_36 = arith.constant 0 : index
    %44 = vector.load %arg2[%c0_33, %c1_34, %43, %c0_35, %c0_36] : memref<1x2x18x16x16xbf16, #tpu.memory_space<vmem>>, vector<1x1x8x16x16xbf16>
    %45 = vector.shape_cast %44 : vector<1x1x8x16x16xbf16> to vector<8x16x16xbf16>
    %46 = vector.shape_cast %45 : vector<8x16x16xbf16> to vector<128x16xbf16>
    %c1_37 = arith.constant 1 : index
    %c0_38 = arith.constant 0 : index
    %c0_39 = arith.constant 0 : index
    %c0_40 = arith.constant 0 : index
    %47 = vector.load %arg3[%c1_37, %c0_38, %c0_39, %c0_40] : memref<4x2x16x128xbf16, #tpu.memory_space<vmem>>, vector<1x1x16x128xbf16>
    %48 = vector.shape_cast %47 : vector<1x1x16x128xbf16> to vector<16x128xbf16>
    %cst_41 = arith.constant dense<0.000000e+00> : vector<128x128xf32>
    %49 = tpu.matmul %46, %48, %cst_41 {dimension_numbers = #tpu.dot_dimension_numbers<[1], [0], [0], [1], [0, 0, 1, 1], [], []>} : vector<128x16xbf16>, vector<16x128xbf16>, vector<128x128xf32> -> vector<128x128xf32>
    %50 = arith.addf %39, %49 : vector<128x128xf32>
    %c8_i32_42 = arith.constant 8 : i32
    %51 = arith.muli %arg1, %c8_i32_42 : i32
    %c0_i32_43 = arith.constant 0 : i32
    %52 = arith.addi %51, %c0_i32_43 : i32
    %c1_i32_44 = arith.constant 1 : i32
    %53 = arith.addi %52, %c1_i32_44 : i32
    %c0_45 = arith.constant 0 : index
    %c1_46 = arith.constant 1 : index
    %54 = arith.index_cast %53 : i32 to index
    %c0_47 = arith.constant 0 : index
    %c0_48 = arith.constant 0 : index
    %55 = vector.load %arg2[%c0_45, %c1_46, %54, %c0_47, %c0_48] : memref<1x2x18x16x16xbf16, #tpu.memory_space<vmem>>, vector<1x1x8x16x16xbf16>
    %56 = vector.shape_cast %55 : vector<1x1x8x16x16xbf16> to vector<8x16x16xbf16>
    %57 = vector.shape_cast %56 : vector<8x16x16xbf16> to vector<128x16xbf16>
    %c1_49 = arith.constant 1 : index
    %c1_50 = arith.constant 1 : index
    %c0_51 = arith.constant 0 : index
    %c0_52 = arith.constant 0 : index
    %58 = vector.load %arg3[%c1_49, %c1_50, %c0_51, %c0_52] : memref<4x2x16x128xbf16, #tpu.memory_space<vmem>>, vector<1x1x16x128xbf16>
    %59 = vector.shape_cast %58 : vector<1x1x16x128xbf16> to vector<16x128xbf16>
    %cst_53 = arith.constant dense<0.000000e+00> : vector<128x128xf32>
    %60 = tpu.matmul %57, %59, %cst_53 {dimension_numbers = #tpu.dot_dimension_numbers<[1], [0], [0], [1], [0, 0, 1, 1], [], []>} : vector<128x16xbf16>, vector<16x128xbf16>, vector<128x128xf32> -> vector<128x128xf32>
    %61 = arith.addf %50, %60 : vector<128x128xf32>
    %62 = vector.broadcast %0 : vector<1x128xf32> to vector<128x128xf32>
    %63 = arith.addf %61, %62 : vector<128x128xf32>
    %64 = arith.truncf %63 : vector<128x128xf32> to vector<128x128xbf16>
    %c0_54 = arith.constant 0 : index
    %c1_55 = arith.constant 1 : index
    %c0_56 = arith.constant 0 : index
    %c0_57 = arith.constant 0 : index
    %65 = vector.load %arg5[%c0_54, %c1_55, %c0_56, %c0_57] : memref<1x4x128x128xbf16, #tpu.memory_space<vmem>>, vector<1x1x128x128xbf16>
    %66 = vector.shape_cast %65 : vector<1x1x128x128xbf16> to vector<128x128xbf16>
    %67 = vector.shape_cast %64 : vector<128x128xbf16> to vector<1x1x128x128xbf16>
    tpu.vector_store %arg5[%c0_54, %c1_55, %c0_56, %c0_57], %67 {strides = array<i32>} : memref<1x4x128x128xbf16, #tpu.memory_space<vmem>>, vector<1x1x128x128xbf16>,
    %cst_58 = arith.constant dense<0.000000e+00> : vector<128xf32>
    %68 = vector.multi_reduction <add>, %63, %cst_58 [0] : vector<128x128xf32> to vector<128xf32>
    %69 = vector.shape_cast %68 : vector<128xf32> to vector<1x128xf32>
    %70 = arith.addf %34, %69 : vector<1x128xf32>
    %71 = arith.mulf %63, %63 : vector<128x128xf32>
    %cst_59 = arith.constant dense<0.000000e+00> : vector<128xf32>
    %72 = vector.multi_reduction <add>, %71, %cst_59 [0] : vector<128x128xf32> to vector<128xf32>
    %73 = vector.shape_cast %72 : vector<128xf32> to vector<1x128xf32>
    %74 = arith.addf %38, %73 : vector<1x128xf32>
    %cst_60 = arith.constant 0.000000e+00 : f32
    %75 = vector.broadcast %cst_60 : f32 to vector<128x128xf32>
    %c8_i32_61 = arith.constant 8 : i32
    %76 = arith.muli %arg1, %c8_i32_61 : i32
    %c1_i32_62 = arith.constant 1 : i32
    %77 = arith.addi %76, %c1_i32_62 : i32
    %c0_i32_63 = arith.constant 0 : i32
    %78 = arith.addi %77, %c0_i32_63 : i32
    %c0_64 = arith.constant 0 : index
    %c0_65 = arith.constant 0 : index
    %79 = arith.index_cast %78 : i32 to index
    %c0_66 = arith.constant 0 : index
    %c0_67 = arith.constant 0 : index
    %80 = vector.load %arg2[%c0_64, %c0_65, %79, %c0_66, %c0_67] : memref<1x2x18x16x16xbf16, #tpu.memory_space<vmem>>, vector<1x1x8x16x16xbf16>
    %81 = vector.shape_cast %80 : vector<1x1x8x16x16xbf16> to vector<8x16x16xbf16>
    %82 = vector.shape_cast %81 : vector<8x16x16xbf16> to vector<128x16xbf16>
    %c2 = arith.constant 2 : index
    %c0_68 = arith.constant 0 : index
    %c0_69 = arith.constant 0 : index
    %c0_70 = arith.constant 0 : index
    %83 = vector.load %arg3[%c2, %c0_68, %c0_69, %c0_70] : memref<4x2x16x128xbf16, #tpu.memory_space<vmem>>, vector<1x1x16x128xbf16>
    %84 = vector.shape_cast %83 : vector<1x1x16x128xbf16> to vector<16x128xbf16>
    %cst_71 = arith.constant dense<0.000000e+00> : vector<128x128xf32>
    %85 = tpu.matmul %82, %84, %cst_71 {dimension_numbers = #tpu.dot_dimension_numbers<[1], [0], [0], [1], [0, 0, 1, 1], [], []>} : vector<128x16xbf16>, vector<16x128xbf16>, vector<128x128xf32> -> vector<128x128xf32>
    %86 = arith.addf %75, %85 : vector<128x128xf32>
    %c8_i32_72 = arith.constant 8 : i32
    %87 = arith.muli %arg1, %c8_i32_72 : i32
    %c1_i32_73 = arith.constant 1 : i32
    %88 = arith.addi %87, %c1_i32_73 : i32
    %c1_i32_74 = arith.constant 1 : i32
    %89 = arith.addi %88, %c1_i32_74 : i32
    %c0_75 = arith.constant 0 : index
    %c0_76 = arith.constant 0 : index
    %90 = arith.index_cast %89 : i32 to index
    %c0_77 = arith.constant 0 : index
    %c0_78 = arith.constant 0 : index
    %91 = vector.load %arg2[%c0_75, %c0_76, %90, %c0_77, %c0_78] : memref<1x2x18x16x16xbf16, #tpu.memory_space<vmem>>, vector<1x1x8x16x16xbf16>
    %92 = vector.shape_cast %91 : vector<1x1x8x16x16xbf16> to vector<8x16x16xbf16>
    %93 = vector.shape_cast %92 : vector<8x16x16xbf16> to vector<128x16xbf16>
    %c2_79 = arith.constant 2 : index
    %c1_80 = arith.constant 1 : index
    %c0_81 = arith.constant 0 : index
    %c0_82 = arith.constant 0 : index
    %94 = vector.load %arg3[%c2_79, %c1_80, %c0_81, %c0_82] : memref<4x2x16x128xbf16, #tpu.memory_space<vmem>>, vector<1x1x16x128xbf16>
    %95 = vector.shape_cast %94 : vector<1x1x16x128xbf16> to vector<16x128xbf16>
    %cst_83 = arith.constant dense<0.000000e+00> : vector<128x128xf32>
    %96 = tpu.matmul %93, %95, %cst_83 {dimension_numbers = #tpu.dot_dimension_numbers<[1], [0], [0], [1], [0, 0, 1, 1], [], []>} : vector<128x16xbf16>, vector<16x128xbf16>, vector<128x128xf32> -> vector<128x128xf32>
    %97 = arith.addf %86, %96 : vector<128x128xf32>
    %98 = vector.broadcast %0 : vector<1x128xf32> to vector<128x128xf32>
    %99 = arith.addf %97, %98 : vector<128x128xf32>
    %100 = arith.truncf %99 : vector<128x128xf32> to vector<128x128xbf16>
    %c0_84 = arith.constant 0 : index
    %c2_85 = arith.constant 2 : index
    %c0_86 = arith.constant 0 : index
    %c0_87 = arith.constant 0 : index
    %101 = vector.load %arg5[%c0_84, %c2_85, %c0_86, %c0_87] : memref<1x4x128x128xbf16, #tpu.memory_space<vmem>>, vector<1x1x128x128xbf16>
    %102 = vector.shape_cast %101 : vector<1x1x128x128xbf16> to vector<128x128xbf16>
    %103 = vector.shape_cast %100 : vector<128x128xbf16> to vector<1x1x128x128xbf16>
    tpu.vector_store %arg5[%c0_84, %c2_85, %c0_86, %c0_87], %103 {strides = array<i32>} : memref<1x4x128x128xbf16, #tpu.memory_space<vmem>>, vector<1x1x128x128xbf16>,
    %cst_88 = arith.constant dense<0.000000e+00> : vector<128xf32>
    %104 = vector.multi_reduction <add>, %99, %cst_88 [0] : vector<128x128xf32> to vector<128xf32>
    %105 = vector.shape_cast %104 : vector<128xf32> to vector<1x128xf32>
    %106 = arith.addf %70, %105 : vector<1x128xf32>
    %107 = arith.mulf %99, %99 : vector<128x128xf32>
    %cst_89 = arith.constant dense<0.000000e+00> : vector<128xf32>
    %108 = vector.multi_reduction <add>, %107, %cst_89 [0] : vector<128x128xf32> to vector<128xf32>
    %109 = vector.shape_cast %108 : vector<128xf32> to vector<1x128xf32>
    %110 = arith.addf %74, %109 : vector<1x128xf32>
    %cst_90 = arith.constant 0.000000e+00 : f32
    %111 = vector.broadcast %cst_90 : f32 to vector<128x128xf32>
    %c8_i32_91 = arith.constant 8 : i32
    %112 = arith.muli %arg1, %c8_i32_91 : i32
    %c1_i32_92 = arith.constant 1 : i32
    %113 = arith.addi %112, %c1_i32_92 : i32
    %c0_i32_93 = arith.constant 0 : i32
    %114 = arith.addi %113, %c0_i32_93 : i32
    %c0_94 = arith.constant 0 : index
    %c1_95 = arith.constant 1 : index
    %115 = arith.index_cast %114 : i32 to index
    %c0_96 = arith.constant 0 : index
    %c0_97 = arith.constant 0 : index
    %116 = vector.load %arg2[%c0_94, %c1_95, %115, %c0_96, %c0_97] : memref<1x2x18x16x16xbf16, #tpu.memory_space<vmem>>, vector<1x1x8x16x16xbf16>
    %117 = vector.shape_cast %116 : vector<1x1x8x16x16xbf16> to vector<8x16x16xbf16>
    %118 = vector.shape_cast %117 : vector<8x16x16xbf16> to vector<128x16xbf16>
    %c3 = arith.constant 3 : index
    %c0_98 = arith.constant 0 : index
    %c0_99 = arith.constant 0 : index
    %c0_100 = arith.constant 0 : index
    %119 = vector.load %arg3[%c3, %c0_98, %c0_99, %c0_100] : memref<4x2x16x128xbf16, #tpu.memory_space<vmem>>, vector<1x1x16x128xbf16>
    %120 = vector.shape_cast %119 : vector<1x1x16x128xbf16> to vector<16x128xbf16>
    %cst_101 = arith.constant dense<0.000000e+00> : vector<128x128xf32>
    %121 = tpu.matmul %118, %120, %cst_101 {dimension_numbers = #tpu.dot_dimension_numbers<[1], [0], [0], [1], [0, 0, 1, 1], [], []>} : vector<128x16xbf16>, vector<16x128xbf16>, vector<128x128xf32> -> vector<128x128xf32>
    %122 = arith.addf %111, %121 : vector<128x128xf32>
    %c8_i32_102 = arith.constant 8 : i32
    %123 = arith.muli %arg1, %c8_i32_102 : i32
    %c1_i32_103 = arith.constant 1 : i32
    %124 = arith.addi %123, %c1_i32_103 : i32
    %c1_i32_104 = arith.constant 1 : i32
    %125 = arith.addi %124, %c1_i32_104 : i32
    %c0_105 = arith.constant 0 : index
    %c1_106 = arith.constant 1 : index
    %126 = arith.index_cast %125 : i32 to index
    %c0_107 = arith.constant 0 : index
    %c0_108 = arith.constant 0 : index
    %127 = vector.load %arg2[%c0_105, %c1_106, %126, %c0_107, %c0_108] : memref<1x2x18x16x16xbf16, #tpu.memory_space<vmem>>, vector<1x1x8x16x16xbf16>
    %128 = vector.shape_cast %127 : vector<1x1x8x16x16xbf16> to vector<8x16x16xbf16>
    %129 = vector.shape_cast %128 : vector<8x16x16xbf16> to vector<128x16xbf16>
    %c3_109 = arith.constant 3 : index
    %c1_110 = arith.constant 1 : index
    %c0_111 = arith.constant 0 : index
    %c0_112 = arith.constant 0 : index
    %130 = vector.load %arg3[%c3_109, %c1_110, %c0_111, %c0_112] : memref<4x2x16x128xbf16, #tpu.memory_space<vmem>>, vector<1x1x16x128xbf16>
    %131 = vector.shape_cast %130 : vector<1x1x16x128xbf16> to vector<16x128xbf16>
    %cst_113 = arith.constant dense<0.000000e+00> : vector<128x128xf32>
    %132 = tpu.matmul %129, %131, %cst_113 {dimension_numbers = #tpu.dot_dimension_numbers<[1], [0], [0], [1], [0, 0, 1, 1], [], []>} : vector<128x16xbf16>, vector<16x128xbf16>, vector<128x128xf32> -> vector<128x128xf32>
    %133 = arith.addf %122, %132 : vector<128x128xf32>
    %134 = vector.broadcast %0 : vector<1x128xf32> to vector<128x128xf32>
    %135 = arith.addf %133, %134 : vector<128x128xf32>
    %136 = arith.truncf %135 : vector<128x128xf32> to vector<128x128xbf16>
    %c0_114 = arith.constant 0 : index
    %c3_115 = arith.constant 3 : index
    %c0_116 = arith.constant 0 : index
    %c0_117 = arith.constant 0 : index
    %137 = vector.load %arg5[%c0_114, %c3_115, %c0_116, %c0_117] : memref<1x4x128x128xbf16, #tpu.memory_space<vmem>>, vector<1x1x128x128xbf16>
    %138 = vector.shape_cast %137 : vector<1x1x128x128xbf16> to vector<128x128xbf16>
    %139 = vector.shape_cast %136 : vector<128x128xbf16> to vector<1x1x128x128xbf16>
    tpu.vector_store %arg5[%c0_114, %c3_115, %c0_116, %c0_117], %139 {strides = array<i32>} : memref<1x4x128x128xbf16, #tpu.memory_space<vmem>>, vector<1x1x128x128xbf16>,
    %cst_118 = arith.constant dense<0.000000e+00> : vector<128xf32>
    %140 = vector.multi_reduction <add>, %135, %cst_118 [0] : vector<128x128xf32> to vector<128xf32>
    %141 = vector.shape_cast %140 : vector<128xf32> to vector<1x128xf32>
    %142 = arith.addf %106, %141 : vector<1x128xf32>
    %143 = arith.mulf %135, %135 : vector<128x128xf32>
    %cst_119 = arith.constant dense<0.000000e+00> : vector<128xf32>
    %144 = vector.multi_reduction <add>, %143, %cst_119 [0] : vector<128x128xf32> to vector<128xf32>
    %145 = vector.shape_cast %144 : vector<128xf32> to vector<1x128xf32>
    %146 = arith.addf %110, %145 : vector<1x128xf32>
    %c0_120 = arith.constant 0 : index
    %c0_121 = arith.constant 0 : index
    %c0_122 = arith.constant 0 : index
    %c0_123 = arith.constant 0 : index
    %147 = vector.load %arg6[%c0_120, %c0_121, %c0_122, %c0_123] : memref<1x1x2x128xf32, #tpu.memory_space<vmem>>, vector<1x1x1x128xf32>
    %148 = vector.shape_cast %147 : vector<1x1x1x128xf32> to vector<1x128xf32>
    %149 = vector.shape_cast %142 : vector<1x128xf32> to vector<1x1x1x128xf32>
    tpu.vector_store %arg6[%c0_120, %c0_121, %c0_122, %c0_123], %149 {strides = array<i32>} : memref<1x1x2x128xf32, #tpu.memory_space<vmem>>, vector<1x1x1x128xf32>,
    %c0_124 = arith.constant 0 : index
    %c0_125 = arith.constant 0 : index
    %c1_126 = arith.constant 1 : index
    %c0_127 = arith.constant 0 : index
    %150 = vector.load %arg6[%c0_124, %c0_125, %c1_126, %c0_127] : memref<1x1x2x128xf32, #tpu.memory_space<vmem>>, vector<1x1x1x128xf32>
    %151 = vector.shape_cast %150 : vector<1x1x1x128xf32> to vector<1x128xf32>
    %152 = vector.shape_cast %146 : vector<1x128xf32> to vector<1x1x1x128xf32>
    tpu.vector_store %arg6[%c0_124, %c0_125, %c1_126, %c0_127], %152 {strides = array<i32>} : memref<1x1x2x128xf32, #tpu.memory_space<vmem>>, vector<1x1x1x128xf32>,
    return
  }
  func.func @transform_0(%arg0: i32, %arg1: i32) -> (i32, i32, i32, i32, i32) {
    %c0_i32 = arith.constant 0 : i32
    %c0_i32_0 = arith.constant 0 : i32
    %c0_i32_1 = arith.constant 0 : i32
    %c0_i32_2 = arith.constant 0 : i32
    %c0_i32_3 = arith.constant 0 : i32
    return %arg0, %c0_i32, %c0_i32_0, %c0_i32_1, %c0_i32_2 : i32, i32, i32, i32, i32
  }
  func.func @transform_1(%arg0: i32, %arg1: i32) -> (i32, i32, i32, i32) {
    %c0_i32 = arith.constant 0 : i32
    %c0_i32_0 = arith.constant 0 : i32
    %c0_i32_1 = arith.constant 0 : i32
    %c0_i32_2 = arith.constant 0 : i32
    %c0_i32_3 = arith.constant 0 : i32
    return %c0_i32, %c0_i32_0, %c0_i32_1, %c0_i32_2 : i32, i32, i32, i32
  }
  func.func @transform_2(%arg0: i32, %arg1: i32) -> (i32, i32) {
    %c0_i32 = arith.constant 0 : i32
    %c0_i32_0 = arith.constant 0 : i32
    %c0_i32_1 = arith.constant 0 : i32
    return %c0_i32, %c0_i32_0 : i32, i32
  }
  func.func @transform_3(%arg0: i32, %arg1: i32) -> (i32, i32, i32, i32) {
    %c0_i32 = arith.constant 0 : i32
    %c0_i32_0 = arith.constant 0 : i32
    %c0_i32_1 = arith.constant 0 : i32
    return %arg0, %c0_i32, %arg1, %c0_i32_0 : i32, i32, i32, i32
  }
  func.func @transform_4(%arg0: i32, %arg1: i32) -> (i32, i32, i32, i32) {
    %c0_i32 = arith.constant 0 : i32
    %c0_i32_0 = arith.constant 0 : i32
    %c0_i32_1 = arith.constant 0 : i32
    return %arg0, %arg1, %c0_i32, %c0_i32_0 : i32, i32, i32, i32
  }
}

</mosaic_0001>

<llo_original>
// kernel: tpu_custom_call.1
$region0: #{tpu_custom_call.1}
  #allocation0 [shape = 'u32[]', space=smem, size = 0x4, offset = 0x4, fixed_abs, tag = 'smem constant byte address 0x4 - core index']
  #allocation1 [shape = 'u32[72,128]{1,0:T(1,128)}', space=vmem, size = 0x9000, scoped, tag = 'internal scratch']
  #allocation6 [shape = 's32[]', space=sflag, size = 0x4, offset = 0, fixed_abs, tag = 'sflag constant byte address 0x0 - dummy sync flag']
  %s0 = inlined_call_operand.vmem [shape: bf16[2,2,18,16,16], index: 0, kind: input, shape index: {}]
  %s1 = inlined_call_operand.vmem [shape: bf16[4,2,16,128], index: 1, kind: input, shape index: {}]
  %s2 = inlined_call_operand.vmem [shape: f32[1,128], index: 2, kind: input, shape index: {}]
  %s3 = inlined_call_operand.hbm [shape: bf16[2,4,256,128], index: 3, kind: output, shape index: {0}]
  %s4 = inlined_call_operand.hbm [shape: f32[2,2,2,128], index: 4, kind: output, shape index: {1}]
  %5 = xla_tuple %s3, %s4
  %s6 = sld [smem:[#allocation0]]
  $region53: #{tpu_custom_call.1} parent=0
    _
  %s8 = ssub.s32 1, %s6
  %s9 = scalar_select 0, %s8, %s6
  $region1: #{tpu_custom_call.1} parent=0
    #allocation2 [shape = 'u8[262144]{0}', space=vmem, size = 0x40000, scoped, tag = 'output window, operand 0']
    #allocation3 [shape = 's32[2]{0}', space=sflag, size = 0x8, scoped, tag = 'scoped memory for tpu_custom_call.1']
    #allocation4 [shape = 'u8[2048]{0}', space=vmem, size = 0x800, scoped, tag = 'output window, operand 1']
    #allocation5 [shape = 's32[2]{0}', space=sflag, size = 0x8, scoped, tag = 'scoped memory for tpu_custom_call.1']
    %10 = vsyncpa [#allocation3], 0
    %s11 = scalar_lea.sflag [#allocation3], 1
    %12 = vsyncpa %s11, 0
    %13 = vsyncpa [#allocation5], 0
    %s14 = scalar_lea.sflag [#allocation5], 1
    %15 = vsyncpa %s14, 0
    loop: start=0, step=1, limit=6
    $region2: #{tpu_custom_call.1} parent=1 // loop_pre_header
      _
    $region3: #{tpu_custom_call.1} parent=1 // loop_header
      %s17 = sphi 0, %s21
      %p18 = scmp.ge.s32.totalorder %s17, 6
      %s24 = sphi 0, %s36
      %s25 = sphi 0, %s32
      %s26 = sphi 0, %s24
      %s27 = sphi 0, %s25
      %s28 = sphi 0, %s26
      %s29 = sphi 0, %s27
      %s39 = sphi 0, %s41
      %s42 = sphi 0, %s39
      %s43 = sphi 0, %s42
      %s59 = sphi 0, %s43
      %s63 = sphi 0, %s63
      %s65 = sphi 0, %s63
      %s66 = sphi 0, %s65
      %s80 = sphi 0, %s66
      %s84 = sphi 0, %s84
      %s86 = sphi 0, %s84
      %s87 = sphi 0, %s86
      %s101 = sphi 0, %s87
      %s109 = sphi 0, %s111
      %s112 = sphi 0, %s109
      %s113 = sphi 0, %s112
      %s129 = sphi 0, %s113
      %s137 = sphi 0, %s139
      %s140 = sphi 0, %s137
      %s141 = sphi 0, %s140
      %s157 = sphi 0, %s141
    $region4: #{tpu_custom_call.1} parent=1 // loop_header_branch
      %20 = sbr.rel (%p18) target = $region8
    $region5: #{tpu_custom_call.1} parent=1 // loop_body
      %s22 = ssub.s32 %s17, 1
      %s23 = ssub.s32 %s17, 2
      %s30 = sadd.s32 1, %s25
      %p31 = scmp.ge.s32.totalorder %s30, 2
      %s32 = scalar_select %p31, 0, %s30
      %s33 = sadd.s32 1, %s24
      %s34 = scalar_select %p31, %s33, %s24
      %p35 = scmp.ge.s32.totalorder %s34, 2
      %s36 = scalar_select %p35, 0, %s34
      %s37 = ssub.s32 %s24, %s36
      %p38 = scmp.eq.s32.totalorder %s37, 0
      %s40 = sadd.s32 %s39, 1
      %s41 = scalar_select %p38, %s39, %s40
      %p44 = pneg %p38
      %p45 = scmp.eq.s32.totalorder %s17, 3
      %p46 = por %p44, %p45
      %p47 = scmp.ne.s32.totalorder %s39, %s42
      %p48 = scmp.eq.s32.totalorder %s17, 0
      %p49 = por %p47, %p48
      %p50 = scmp.ne.s32.totalorder %s39, %s42
      %p51 = scmp.eq.s32.totalorder %s22, 3
      %p52 = por %p50, %p51
      %p53 = scmp.ne.s32.totalorder %s42, %s43
      %p54 = scmp.eq.s32.totalorder %s22, 0
      %p55 = por %p53, %p54
      %p56 = scmp.ne.s32.totalorder %s42, %s43
      %p57 = scmp.eq.s32.totalorder %s23, 3
      %p58 = por %p56, %p57
      %p60 = scmp.ne.s32.totalorder %s43, %s59
      %p61 = scmp.eq.s32.totalorder %s23, 0
      %p62 = por %p60, %p61
      %s64 = sadd.s32 %s63, 1
      %p67 = scmp.eq.s32.totalorder %s17, 3
      %p68 = scmp.ne.s32.totalorder %s63, %s65
      %p69 = scmp.eq.s32.totalorder %s17, 0
      %p70 = por %p68, %p69
      %p71 = scmp.ne.s32.totalorder %s63, %s65
      %p72 = scmp.eq.s32.totalorder %s22, 3
      %p73 = por %p71, %p72
      %p74 = scmp.ne.s32.totalorder %s65, %s66
      %p75 = scmp.eq.s32.totalorder %s22, 0
      %p76 = por %p74, %p75
      %p77 = scmp.ne.s32.totalorder %s65, %s66
      %p78 = scmp.eq.s32.totalorder %s23, 3
      %p79 = por %p77, %p78
      %p81 = scmp.ne.s32.totalorder %s66, %s80
      %p82 = scmp.eq.s32.totalorder %s23, 0
      %p83 = por %p81, %p82
      %s85 = sadd.s32 %s84, 1
      %p88 = scmp.eq.s32.totalorder %s17, 3
      %p89 = scmp.ne.s32.totalorder %s84, %s86
      %p90 = scmp.eq.s32.totalorder %s17, 0
      %p91 = por %p89, %p90
      %p92 = scmp.ne.s32.totalorder %s84, %s86
      %p93 = scmp.eq.s32.totalorder %s22, 3
      %p94 = por %p92, %p93
      %p95 = scmp.ne.s32.totalorder %s86, %s87
      %p96 = scmp.eq.s32.totalorder %s22, 0
      %p97 = por %p95, %p96
      %p98 = scmp.ne.s32.totalorder %s86, %s87
      %p99 = scmp.eq.s32.totalorder %s23, 3
      %p100 = por %p98, %p99
      %p102 = scmp.ne.s32.totalorder %s87, %s101
      %p103 = scmp.eq.s32.totalorder %s23, 0
      %p104 = por %p102, %p103
      %s105 = ssub.s32 %s24, %s36
      %s106 = ssub.s32 %s25, %s32
      %s107 = sor.u32 %s105, %s106
      %p108 = scmp.eq.s32.totalorder %s107, 0
      %s110 = sadd.s32 %s109, 1
      %s111 = scalar_select %p108, %s109, %s110
      %p114 = pneg %p108
      %p115 = scmp.eq.s32.totalorder %s17, 3
      %p116 = por %p114, %p115
      %p117 = scmp.ne.s32.totalorder %s109, %s112
      %p118 = scmp.eq.s32.totalorder %s17, 0
      %p119 = por %p117, %p118
      %p120 = scmp.ne.s32.totalorder %s109, %s112
      %p121 = scmp.eq.s32.totalorder %s22, 3
      %p122 = por %p120, %p121
      %p123 = scmp.ne.s32.totalorder %s112, %s113
      %p124 = scmp.eq.s32.totalorder %s22, 0
      %p125 = por %p123, %p124
      %p126 = scmp.ne.s32.totalorder %s112, %s113
      %p127 = scmp.eq.s32.totalorder %s23, 3
      %p128 = por %p126, %p127
      %p130 = scmp.ne.s32.totalorder %s113, %s129
      %p131 = scmp.eq.s32.totalorder %s23, 0
      %p132 = por %p130, %p131
      %s133 = ssub.s32 %s24, %s36
      %s134 = ssub.s32 %s25, %s32
      %s135 = sor.u32 %s133, %s134
      %p136 = scmp.eq.s32.totalorder %s135, 0
      %s138 = sadd.s32 %s137, 1
      %s139 = scalar_select %p136, %s137, %s138
      %p142 = pneg %p136
      %p143 = scmp.eq.s32.totalorder %s17, 3
      %p144 = por %p142, %p143
      %p145 = scmp.ne.s32.totalorder %s137, %s140
      %p146 = scmp.eq.s32.totalorder %s17, 0
      %p147 = por %p145, %p146
      %p148 = scmp.ne.s32.totalorder %s137, %s140
      %p149 = scmp.eq.s32.totalorder %s22, 3
      %p150 = por %p148, %p149
      %p151 = scmp.ne.s32.totalorder %s140, %s141
      %p152 = scmp.eq.s32.totalorder %s22, 0
      %p153 = por %p151, %p152
      %p154 = scmp.ne.s32.totalorder %s140, %s141
      %p155 = scmp.eq.s32.totalorder %s23, 3
      %p156 = por %p154, %p155
      %p158 = scmp.ne.s32.totalorder %s141, %s157
      %p159 = scmp.eq.s32.totalorder %s23, 0
      %p160 = por %p158, %p159
      %p161 = scmp.le.s32.totalorder 1, %s17
      %p162 = scmp.lt.s32.totalorder %s17, 5
      %p163 = pnand %p161, %p162
      %p164 = pneg %p163
      // Predicated region
      $region9: #{tpu_custom_call.1} parent=5 // pred_check
        _
      $region10: #{tpu_custom_call.1} parent=5 // pred_check_branch
        %166 = sbr.rel (%p163) target = $region12
      $region11: #{tpu_custom_call.1} parent=5 // pred_region
        %s167 = ssub.s32 %s17, 1
        // Predicated region
        $region13: #{tpu_custom_call.1} parent=11 // pred_check
          %p168 = pneg %p76
        $region14: #{tpu_custom_call.1} parent=11 // pred_check_branch
          %170 = sbr.rel (%p168) target = $region16
        $region15: #{tpu_custom_call.1} parent=11 // pred_region
          _
        $region16: #{tpu_custom_call.1} parent=11 // pred_fallthru
          _
        // Predicated region
        $region17: #{tpu_custom_call.1} parent=11 // pred_check
          %p171 = pneg %p97
        $region18: #{tpu_custom_call.1} parent=11 // pred_check_branch
          %173 = sbr.rel (%p171) target = $region20
        $region19: #{tpu_custom_call.1} parent=11 // pred_region
          _
        $region20: #{tpu_custom_call.1} parent=11 // pred_fallthru
          _
      $region12: #{tpu_custom_call.1} parent=5 // pred_fallthru
        _
      %p174 = scmp.lt.s32.totalorder %s17, 4
      // Predicated region
      $region21: #{tpu_custom_call.1} parent=5 // pred_check
        %p175 = pneg %p174
      $region22: #{tpu_custom_call.1} parent=5 // pred_check_branch
        %177 = sbr.rel (%p175) target = $region24
      $region23: #{tpu_custom_call.1} parent=5 // pred_region
        // Predicated region
        $region25: #{tpu_custom_call.1} parent=23 // pred_check
          %p178 = pneg %p49
        $region26: #{tpu_custom_call.1} parent=23 // pred_check_branch
          %180 = sbr.rel (%p178) target = $region28
        $region27: #{tpu_custom_call.1} parent=23 // pred_region
          %p181 = scmp.lt.s32.totalorder %s24, 1
          %s182 = scalar_select %p181, %s24, 1
          %s183 = smul.addr %s182, 72
          %s184 = smul.addr %s183, 4
          %s185 = scalar_lea.vmem %s0, %s184
        $region28: #{tpu_custom_call.1} parent=23 // pred_fallthru
          _
      $region24: #{tpu_custom_call.1} parent=5 // pred_fallthru
        _
      %p186 = scmp.le.s32.totalorder 1, %s17
      %p187 = scmp.lt.s32.totalorder %s17, 5
      %p188 = pnand %p186, %p187
      %p189 = pneg %p188
      // Predicated region
      $region29: #{tpu_custom_call.1} parent=5 // pred_check
        _
      $region30: #{tpu_custom_call.1} parent=5 // pred_check_branch
        %191 = sbr.rel (%p188) target = $region32
      $region31: #{tpu_custom_call.1} parent=5 // pred_region
        %s192 = ssub.s32 %s17, 1
        %p193 = scmp.lt.s32.totalorder %s26, 1
        %s194 = scalar_select %p193, %s26, 1
        %s195 = smul.addr %s194, 72
        %s196 = smul.addr %s195, 4
        %s197 = scalar_lea.vmem %s0, %s196
        %p198 = pneg %p55
        %p199 = pneg %p52
        %p200 = pneg %p76
        %p201 = pneg %p73
        %p202 = pneg %p97
        %p203 = pneg %p94
        %p204 = pneg %p125
        %p205 = pneg %p122
        %s206 = sand.u32 %s112, 1
        %s207 = scalar_lea.sflag [#allocation3], %s206
        %s208 = sand.u32 %s112, 1
        %s209 = smul.addr %s208, 256
        %s210 = scalar_lea.vmem [#allocation2], %s209
        %p211 = pneg %p153
        %p212 = pneg %p150
        %s213 = sand.u32 %s140, 1
        %s214 = scalar_lea.sflag [#allocation5], %s213
        %s215 = sand.u32 %s140, 1
        %s216 = smul.addr %s215, 2
        %s217 = scalar_lea.vmem [#allocation4], %s216
        %p218 = scmp.lt.s32.totalorder %s26, 1
        %s219 = scalar_select %p218, %s26, 1
        %s220 = smul.addr %s219, 72
        %s221 = smul.addr %s220, 4
        %s222 = scalar_lea.vmem %s0, %s221
        %s223 = smul.u32 16, %s27
        %v225 = vld [vmem:[%s2] sm:$0x1]
        %s226 = smul.u32 %s27, 8
        %s227 = smul.u32 %s226, 2
        %s228 = smul.addr %s227, 4
        %s229 = scalar_lea.vmem %s222, %s228
        %v230 = vld [vmem:[%s229] sm:$0xf]
        %v231 = vld [vmem:[%s229 + $0x4] sm:$0xf]
        %v232 = vld [vmem:[%s229 + $0x8] sm:$0xf]
        %v233 = vld [vmem:[%s229 + $0xc] sm:$0xf]
        %v234 = vld [vmem:[%s229 + $0x10] sm:$0xf]
        %v235 = vld [vmem:[%s229 + $0x14] sm:$0xf]
        %v236 = vld [vmem:[%s229 + $0x18] sm:$0xf]
        %v237 = vld [vmem:[%s229 + $0x1c] sm:$0xf]
        %v238 = vld [vmem:[%s229 + $0x20] sm:$0xf]
        %v239 = vld [vmem:[%s229 + $0x24] sm:$0xf]
        %v240 = vld [vmem:[%s229 + $0x28] sm:$0xf]
        %v241 = vld [vmem:[%s229 + $0x2c] sm:$0xf]
        %v242 = vld [vmem:[%s229 + $0x30] sm:$0xf]
        %v243 = vld [vmem:[%s229 + $0x34] sm:$0xf]
        %v244 = vld [vmem:[%s229 + $0x38] sm:$0xf]
        %v245 = vld [vmem:[%s229 + $0x3c] sm:$0xf]
        %v246 = vld [vmem:[%s1] sm:$0xf]
        %v247 = vld [vmem:[%s1 + $0x4] sm:$0xf]
        %s248 = sadd.s32 %s226, 1
        %s249 = smul.u32 %s248, 2
        %s250 = smul.addr %s249, 4
        %s251 = scalar_lea.vmem %s222, %s250
        %v252 = vld [vmem:[%s251] sm:$0xf]
        %v253 = vld [vmem:[%s251 + $0x4] sm:$0xf]
        %v254 = vld [vmem:[%s251 + $0x8] sm:$0xf]
        %v255 = vld [vmem:[%s251 + $0xc] sm:$0xf]
        %v256 = vld [vmem:[%s251 + $0x10] sm:$0xf]
        %v257 = vld [vmem:[%s251 + $0x14] sm:$0xf]
        %v258 = vld [vmem:[%s251 + $0x18] sm:$0xf]
        %v259 = vld [vmem:[%s251 + $0x1c] sm:$0xf]
        %v260 = vld [vmem:[%s251 + $0x20] sm:$0xf]
        %v261 = vld [vmem:[%s251 + $0x24] sm:$0xf]
        %v262 = vld [vmem:[%s251 + $0x28] sm:$0xf]
        %v263 = vld [vmem:[%s251 + $0x2c] sm:$0xf]
        %v264 = vld [vmem:[%s251 + $0x30] sm:$0xf]
        %v265 = vld [vmem:[%s251 + $0x34] sm:$0xf]
        %v266 = vld [vmem:[%s251 + $0x38] sm:$0xf]
        %v267 = vld [vmem:[%s251 + $0x3c] sm:$0xf]
        %s268 = scalar_lea.vmem %s1, 8
        %v269 = vld [vmem:[%s268] sm:$0xf]
        %v270 = vld [vmem:[%s268 + $0x4] sm:$0xf]
        %v287 = vunpack.c.l.b16 %v252
        %v288 = vunpack.c.l.b16 %v253
        %v289 = vunpack.c.l.b16 %v254
        %v290 = vunpack.c.l.b16 %v255
        %v291 = vunpack.c.l.b16 %v256
        %v292 = vunpack.c.l.b16 %v257
        %v293 = vunpack.c.l.b16 %v258
        %v294 = vunpack.c.l.b16 %v259
        %v295 = vunpack.c.l.b16 %v260
        %v296 = vunpack.c.l.b16 %v261
        %v297 = vunpack.c.l.b16 %v262
        %v298 = vunpack.c.l.b16 %v263
        %v299 = vunpack.c.l.b16 %v264
        %v300 = vunpack.c.l.b16 %v265
        %v301 = vunpack.c.l.b16 %v266
        %v302 = vunpack.c.l.b16 %v267
        %v303 = vpack.c.b16 %v288, %v287
        %v304 = vpack.c.b16 %v290, %v289
        %v305 = vpack.c.b16 %v292, %v291
        %v306 = vpack.c.b16 %v294, %v293
        %v307 = vpack.c.b16 %v296, %v295
        %v308 = vpack.c.b16 %v298, %v297
        %v309 = vpack.c.b16 %v300, %v299
        %v310 = vpack.c.b16 %v302, %v301
        %v313 = vunpack.c.l.b16 %v269
        %v314 = vunpack.c.l.b16 %v270
        %v315 = vpack.c.b16 %v314, %v313
        %vm317 = vcmask 130048
        %v319 = vsel %vm317, %v303, 0
        %v322 = vsel %vm317, %v304, 0
        %v325 = vsel %vm317, %v305, 0
        %v328 = vsel %vm317, %v306, 0
        %v331 = vsel %vm317, %v307, 0
        %v334 = vsel %vm317, %v308, 0
        %v337 = vsel %vm317, %v309, 0
        %v340 = vsel %vm317, %v310, 0
        %342 = vmatpush.bf16.msra.mxu0 0
        %343 = vmatpush.bf16.msra.mxu0 0
        %344 = vmatpush.bf16.msra.mxu0 0
        %345 = vmatpush.bf16.msra.mxu0 0
        %346 = vmatpush.bf16.msra.mxu0 0
        %347 = vmatpush.bf16.msra.mxu0 0
        %348 = vmatpush.bf16.msra.mxu0 0
        %349 = vmatpush.bf16.msra.mxu0 %v315
        %350 = vmatmul.bf16.gmra.mxu0 %v319
        %v351 = vpop.f32.mrf.mxu0
        %v352 = vadd.f32 0.0, %v351
        %v353 = vpop.f32.mrf.mxu0
        %v354 = vadd.f32 0.0, %v353
        %355 = vmatmul.bf16.gmra.mxu0 %v322
        %v356 = vpop.f32.mrf.mxu0
        %v357 = vadd.f32 0.0, %v356
        %v358 = vpop.f32.mrf.mxu0
        %v359 = vadd.f32 0.0, %v358
        %360 = vmatmul.bf16.gmra.mxu0 %v325
        %v361 = vpop.f32.mrf.mxu0
        %v362 = vadd.f32 0.0, %v361
        %v363 = vpop.f32.mrf.mxu0
        %v364 = vadd.f32 0.0, %v363
        %365 = vmatmul.bf16.gmra.mxu0 %v328
        %v366 = vpop.f32.mrf.mxu0
        %v367 = vadd.f32 0.0, %v366
        %v368 = vpop.f32.mrf.mxu0
        %v369 = vadd.f32 0.0, %v368
        %370 = vmatmul.bf16.gmra.mxu0 %v331
        %v371 = vpop.f32.mrf.mxu0
        %v372 = vadd.f32 0.0, %v371
        %v373 = vpop.f32.mrf.mxu0
        %v374 = vadd.f32 0.0, %v373
        %375 = vmatmul.bf16.gmra.mxu0 %v334
        %v376 = vpop.f32.mrf.mxu0
        %v377 = vadd.f32 0.0, %v376
        %v378 = vpop.f32.mrf.mxu0
        %v379 = vadd.f32 0.0, %v378
        %380 = vmatmul.bf16.gmra.mxu0 %v337
        %v381 = vpop.f32.mrf.mxu0
        %v382 = vadd.f32 0.0, %v381
        %v383 = vpop.f32.mrf.mxu0
        %v384 = vadd.f32 0.0, %v383
        %385 = vmatmul.bf16.gmra.mxu0 %v340
        %v386 = vpop.f32.mrf.mxu0
        %v387 = vadd.f32 0.0, %v386
        %v388 = vpop.f32.mrf.mxu0
        %v389 = vadd.f32 0.0, %v388
        %390 = vdwg.mxu0
        %v407 = vunpack.c.l.b16 %v230
        %v408 = vunpack.c.l.b16 %v231
        %v409 = vunpack.c.l.b16 %v232
        %v410 = vunpack.c.l.b16 %v233
        %v411 = vunpack.c.l.b16 %v234
        %v412 = vunpack.c.l.b16 %v235
        %v413 = vunpack.c.l.b16 %v236
        %v414 = vunpack.c.l.b16 %v237
        %v415 = vunpack.c.l.b16 %v238
        %v416 = vunpack.c.l.b16 %v239
        %v417 = vunpack.c.l.b16 %v240
        %v418 = vunpack.c.l.b16 %v241
        %v419 = vunpack.c.l.b16 %v242
        %v420 = vunpack.c.l.b16 %v243
        %v421 = vunpack.c.l.b16 %v244
        %v422 = vunpack.c.l.b16 %v245
        %v423 = vpack.c.b16 %v408, %v407
        %v424 = vpack.c.b16 %v410, %v409
        %v425 = vpack.c.b16 %v412, %v411
        %v426 = vpack.c.b16 %v414, %v413
        %v427 = vpack.c.b16 %v416, %v415
        %v428 = vpack.c.b16 %v418, %v417
        %v429 = vpack.c.b16 %v420, %v419
        %v430 = vpack.c.b16 %v422, %v421
        %v433 = vunpack.c.l.b16 %v246
        %v434 = vunpack.c.l.b16 %v247
        %v435 = vpack.c.b16 %v434, %v433
        %v438 = vsel %vm317, %v423, 0
        %v441 = vsel %vm317, %v424, 0
        %v444 = vsel %vm317, %v425, 0
        %v447 = vsel %vm317, %v426, 0
        %v450 = vsel %vm317, %v427, 0
        %v453 = vsel %vm317, %v428, 0
        %v456 = vsel %vm317, %v429, 0
        %v459 = vsel %vm317, %v430, 0
        %461 = vmatpush.bf16.msra.mxu0 0
        %462 = vmatpush.bf16.msra.mxu0 0
        %463 = vmatpush.bf16.msra.mxu0 0
        %464 = vmatpush.bf16.msra.mxu0 0
        %465 = vmatpush.bf16.msra.mxu0 0
        %466 = vmatpush.bf16.msra.mxu0 0
        %467 = vmatpush.bf16.msra.mxu0 0
        %468 = vmatpush.bf16.msra.mxu0 %v435
        %469 = vmatmul.bf16.gmra.mxu0 %v438
        %v470 = vpop.f32.mrf.mxu0
        %v471 = vadd.f32 %v352, %v470
        %v472 = vpop.f32.mrf.mxu0
        %v473 = vadd.f32 %v354, %v472
        %474 = vmatmul.bf16.gmra.mxu0 %v441
        %v475 = vpop.f32.mrf.mxu0
        %v476 = vadd.f32 %v357, %v475
        %v477 = vpop.f32.mrf.mxu0
        %v478 = vadd.f32 %v359, %v477
        %479 = vmatmul.bf16.gmra.mxu0 %v444
        %v480 = vpop.f32.mrf.mxu0
        %v481 = vadd.f32 %v362, %v480
        %v482 = vpop.f32.mrf.mxu0
        %v483 = vadd.f32 %v364, %v482
        %484 = vmatmul.bf16.gmra.mxu0 %v447
        %v485 = vpop.f32.mrf.mxu0
        %v486 = vadd.f32 %v367, %v485
        %v487 = vpop.f32.mrf.mxu0
        %v488 = vadd.f32 %v369, %v487
        %489 = vmatmul.bf16.gmra.mxu0 %v450
        %v490 = vpop.f32.mrf.mxu0
        %v491 = vadd.f32 %v372, %v490
        %v492 = vpop.f32.mrf.mxu0
        %v493 = vadd.f32 %v374, %v492
        %494 = vmatmul.bf16.gmra.mxu0 %v453
        %v495 = vpop.f32.mrf.mxu0
        %v496 = vadd.f32 %v377, %v495
        %v497 = vpop.f32.mrf.mxu0
        %v498 = vadd.f32 %v379, %v497
        %499 = vmatmul.bf16.gmra.mxu0 %v456
        %v500 = vpop.f32.mrf.mxu0
        %v501 = vadd.f32 %v382, %v500
        %v502 = vpop.f32.mrf.mxu0
        %v503 = vadd.f32 %v384, %v502
        %504 = vmatmul.bf16.gmra.mxu0 %v459
        %v505 = vpop.f32.mrf.mxu0
        %v506 = vadd.f32 %v387, %v505
        %v507 = vpop.f32.mrf.mxu0
        %v508 = vadd.f32 %v389, %v507
        %509 = vdwg.mxu0
        %v511 = vperm.slane %v225, 0
        %v513 = vadd.f32 %v471, %v511
        %v514 = vadd.f32 %v473, %v511
        %v515 = vadd.f32 %v476, %v511
        %v516 = vadd.f32 %v478, %v511
        %v517 = vadd.f32 %v481, %v511
        %v518 = vadd.f32 %v483, %v511
        %v519 = vadd.f32 %v486, %v511
        %v520 = vadd.f32 %v488, %v511
        %v521 = vadd.f32 %v491, %v511
        %v522 = vadd.f32 %v493, %v511
        %v523 = vadd.f32 %v496, %v511
        %v524 = vadd.f32 %v498, %v511
        %v525 = vadd.f32 %v501, %v511
        %v526 = vadd.f32 %v503, %v511
        %v527 = vadd.f32 %v506, %v511
        %v528 = vadd.f32 %v508, %v511
        %v529 = vpack.c.bf16 %v513, %v513
        %v530 = vpack.c.bf16 %v514, %v514
        %v531 = vpack.c.bf16 %v515, %v515
        %v532 = vpack.c.bf16 %v516, %v516
        %v533 = vpack.c.bf16 %v517, %v517
        %v534 = vpack.c.bf16 %v518, %v518
        %v535 = vpack.c.bf16 %v519, %v519
        %v536 = vpack.c.bf16 %v520, %v520
        %v537 = vpack.c.bf16 %v521, %v521
        %v538 = vpack.c.bf16 %v522, %v522
        %v539 = vpack.c.bf16 %v523, %v523
        %v540 = vpack.c.bf16 %v524, %v524
        %v541 = vpack.c.bf16 %v525, %v525
        %v542 = vpack.c.bf16 %v526, %v526
        %v543 = vpack.c.bf16 %v527, %v527
        %v544 = vpack.c.bf16 %v528, %v528
        %545 = vst [vmem:[%s210] sm:$0xf] %v529
        %546 = vst [vmem:[%s210 + $0x4] sm:$0xf] %v530
        %547 = vst [vmem:[%s210 + $0x8] sm:$0xf] %v531
        %548 = vst [vmem:[%s210 + $0xc] sm:$0xf] %v532
        %549 = vst [vmem:[%s210 + $0x10] sm:$0xf] %v533
        %550 = vst [vmem:[%s210 + $0x14] sm:$0xf] %v534
        %551 = vst [vmem:[%s210 + $0x18] sm:$0xf] %v535
        %552 = vst [vmem:[%s210 + $0x1c] sm:$0xf] %v536
        %553 = vst [vmem:[%s210 + $0x20] sm:$0xf] %v537
        %554 = vst [vmem:[%s210 + $0x24] sm:$0xf] %v538
        %555 = vst [vmem:[%s210 + $0x28] sm:$0xf] %v539
        %556 = vst [vmem:[%s210 + $0x2c] sm:$0xf] %v540
        %557 = vst [vmem:[%s210 + $0x30] sm:$0xf] %v541
        %558 = vst [vmem:[%s210 + $0x34] sm:$0xf] %v542
        %559 = vst [vmem:[%s210 + $0x38] sm:$0xf] %v543
        %560 = vst [vmem:[%s210 + $0x3c] sm:$0xf] %v544
        %v561 = vadd.f32 %v513, %v514
        %v562 = vadd.f32 %v561, %v515
        %v563 = vadd.f32 %v562, %v516
        %v564 = vadd.f32 %v563, %v517
        %v565 = vadd.f32 %v564, %v518
        %v566 = vadd.f32 %v565, %v519
        %v567 = vadd.f32 %v566, %v520
        %v568 = vadd.f32 %v567, %v521
        %v569 = vadd.f32 %v568, %v522
        %v570 = vadd.f32 %v569, %v523
        %v571 = vadd.f32 %v570, %v524
        %v572 = vadd.f32 %v571, %v525
        %v573 = vadd.f32 %v572, %v526
        %v574 = vadd.f32 %v573, %v527
        %v575 = vadd.f32 %v574, %v528
        %v576 = vrot.slane %v575, 4
        %v577 = vadd.f32 %v575, %v576
        %v578 = vrot.slane %v577, 2
        %v579 = vadd.f32 %v577, %v578
        %v580 = vrot.slane %v579, 1
        %v581 = vadd.f32 %v579, %v580
        %v582 = vadd.f32 %v581, 0.0
        %v583 = vmul.f32 %v513, %v513
        %v584 = vmul.f32 %v514, %v514
        %v585 = vmul.f32 %v515, %v515
        %v586 = vmul.f32 %v516, %v516
        %v587 = vmul.f32 %v517, %v517
        %v588 = vmul.f32 %v518, %v518
        %v589 = vmul.f32 %v519, %v519
        %v590 = vmul.f32 %v520, %v520
        %v591 = vmul.f32 %v521, %v521
        %v592 = vmul.f32 %v522, %v522
        %v593 = vmul.f32 %v523, %v523
        %v594 = vmul.f32 %v524, %v524
        %v595 = vmul.f32 %v525, %v525
        %v596 = vmul.f32 %v526, %v526
        %v597 = vmul.f32 %v527, %v527
        %v598 = vmul.f32 %v528, %v528
        %v599 = vadd.f32 %v583, %v584
        %v600 = vadd.f32 %v599, %v585
        %v601 = vadd.f32 %v600, %v586
        %v602 = vadd.f32 %v601, %v587
        %v603 = vadd.f32 %v602, %v588
        %v604 = vadd.f32 %v603, %v589
        %v605 = vadd.f32 %v604, %v590
        %v606 = vadd.f32 %v605, %v591
        %v607 = vadd.f32 %v606, %v592
        %v608 = vadd.f32 %v607, %v593
        %v609 = vadd.f32 %v608, %v594
        %v610 = vadd.f32 %v609, %v595
        %v611 = vadd.f32 %v610, %v596
        %v612 = vadd.f32 %v611, %v597
        %v613 = vadd.f32 %v612, %v598
        %v614 = vrot.slane %v613, 4
        %v615 = vadd.f32 %v613, %v614
        %v616 = vrot.slane %v615, 2
        %v617 = vadd.f32 %v615, %v616
        %v618 = vrot.slane %v617, 1
        %v619 = vadd.f32 %v617, %v618
        %v620 = vadd.f32 %v619, 0.0
        %s621 = sadd.s32 %s227, 36
        %s622 = smul.addr %s621, 4
        %s623 = scalar_lea.vmem %s222, %s622
        %v624 = vld [vmem:[%s623] sm:$0xf]
        %v625 = vld [vmem:[%s623 + $0x4] sm:$0xf]
        %v626 = vld [vmem:[%s623 + $0x8] sm:$0xf]
        %v627 = vld [vmem:[%s623 + $0xc] sm:$0xf]
        %v628 = vld [vmem:[%s623 + $0x10] sm:$0xf]
        %v629 = vld [vmem:[%s623 + $0x14] sm:$0xf]
        %v630 = vld [vmem:[%s623 + $0x18] sm:$0xf]
        %v631 = vld [vmem:[%s623 + $0x1c] sm:$0xf]
        %v632 = vld [vmem:[%s623 + $0x20] sm:$0xf]
        %v633 = vld [vmem:[%s623 + $0x24] sm:$0xf]
        %v634 = vld [vmem:[%s623 + $0x28] sm:$0xf]
        %v635 = vld [vmem:[%s623 + $0x2c] sm:$0xf]
        %v636 = vld [vmem:[%s623 + $0x30] sm:$0xf]
        %v637 = vld [vmem:[%s623 + $0x34] sm:$0xf]
        %v638 = vld [vmem:[%s623 + $0x38] sm:$0xf]
        %v639 = vld [vmem:[%s623 + $0x3c] sm:$0xf]
        %s640 = scalar_lea.vmem %s1, 16
        %v641 = vld [vmem:[%s640] sm:$0xf]
        %v642 = vld [vmem:[%s640 + $0x4] sm:$0xf]
        %s643 = sadd.s32 %s249, 36
        %s644 = smul.addr %s643, 4
        %s645 = scalar_lea.vmem %s222, %s644
        %v646 = vld [vmem:[%s645] sm:$0xf]
        %v647 = vld [vmem:[%s645 + $0x4] sm:$0xf]
        %v648 = vld [vmem:[%s645 + $0x8] sm:$0xf]
        %v649 = vld [vmem:[%s645 + $0xc] sm:$0xf]
        %v650 = vld [vmem:[%s645 + $0x10] sm:$0xf]
        %v651 = vld [vmem:[%s645 + $0x14] sm:$0xf]
        %v652 = vld [vmem:[%s645 + $0x18] sm:$0xf]
        %v653 = vld [vmem:[%s645 + $0x1c] sm:$0xf]
        %v654 = vld [vmem:[%s645 + $0x20] sm:$0xf]
        %v655 = vld [vmem:[%s645 + $0x24] sm:$0xf]
        %v656 = vld [vmem:[%s645 + $0x28] sm:$0xf]
        %v657 = vld [vmem:[%s645 + $0x2c] sm:$0xf]
        %v658 = vld [vmem:[%s645 + $0x30] sm:$0xf]
        %v659 = vld [vmem:[%s645 + $0x34] sm:$0xf]
        %v660 = vld [vmem:[%s645 + $0x38] sm:$0xf]
        %v661 = vld [vmem:[%s645 + $0x3c] sm:$0xf]
        %s662 = scalar_lea.vmem %s1, 24
        %v663 = vld [vmem:[%s662] sm:$0xf]
        %v664 = vld [vmem:[%s662 + $0x4] sm:$0xf]
        %v681 = vunpack.c.l.b16 %v646
        %v682 = vunpack.c.l.b16 %v647
        %v683 = vunpack.c.l.b16 %v648
        %v684 = vunpack.c.l.b16 %v649
        %v685 = vunpack.c.l.b16 %v650
        %v686 = vunpack.c.l.b16 %v651
        %v687 = vunpack.c.l.b16 %v652
        %v688 = vunpack.c.l.b16 %v653
        %v689 = vunpack.c.l.b16 %v654
        %v690 = vunpack.c.l.b16 %v655
        %v691 = vunpack.c.l.b16 %v656
        %v692 = vunpack.c.l.b16 %v657
        %v693 = vunpack.c.l.b16 %v658
        %v694 = vunpack.c.l.b16 %v659
        %v695 = vunpack.c.l.b16 %v660
        %v696 = vunpack.c.l.b16 %v661
        %v697 = vpack.c.b16 %v682, %v681
        %v698 = vpack.c.b16 %v684, %v683
        %v699 = vpack.c.b16 %v686, %v685
        %v700 = vpack.c.b16 %v688, %v687
        %v701 = vpack.c.b16 %v690, %v689
        %v702 = vpack.c.b16 %v692, %v691
        %v703 = vpack.c.b16 %v694, %v693
        %v704 = vpack.c.b16 %v696, %v695
        %v707 = vunpack.c.l.b16 %v663
        %v708 = vunpack.c.l.b16 %v664
        %v709 = vpack.c.b16 %v708, %v707
        %v712 = vsel %vm317, %v697, 0
        %v715 = vsel %vm317, %v698, 0
        %v718 = vsel %vm317, %v699, 0
        %v721 = vsel %vm317, %v700, 0
        %v724 = vsel %vm317, %v701, 0
        %v727 = vsel %vm317, %v702, 0
        %v730 = vsel %vm317, %v703, 0
        %v733 = vsel %vm317, %v704, 0
        %735 = vmatpush.bf16.msra.mxu0 0
        %736 = vmatpush.bf16.msra.mxu0 0
        %737 = vmatpush.bf16.msra.mxu0 0
        %738 = vmatpush.bf16.msra.mxu0 0
        %739 = vmatpush.bf16.msra.mxu0 0
        %740 = vmatpush.bf16.msra.mxu0 0
        %741 = vmatpush.bf16.msra.mxu0 0
        %742 = vmatpush.bf16.msra.mxu0 %v709
        %743 = vmatmul.bf16.gmra.mxu0 %v712
        %v744 = vpop.f32.mrf.mxu0
        %v745 = vadd.f32 0.0, %v744
        %v746 = vpop.f32.mrf.mxu0
        %v747 = vadd.f32 0.0, %v746
        %748 = vmatmul.bf16.gmra.mxu0 %v715
        %v749 = vpop.f32.mrf.mxu0
        %v750 = vadd.f32 0.0, %v749
        %v751 = vpop.f32.mrf.mxu0
        %v752 = vadd.f32 0.0, %v751
        %753 = vmatmul.bf16.gmra.mxu0 %v718
        %v754 = vpop.f32.mrf.mxu0
        %v755 = vadd.f32 0.0, %v754
        %v756 = vpop.f32.mrf.mxu0
        %v757 = vadd.f32 0.0, %v756
        %758 = vmatmul.bf16.gmra.mxu0 %v721
        %v759 = vpop.f32.mrf.mxu0
        %v760 = vadd.f32 0.0, %v759
        %v761 = vpop.f32.mrf.mxu0
        %v762 = vadd.f32 0.0, %v761
        %763 = vmatmul.bf16.gmra.mxu0 %v724
        %v764 = vpop.f32.mrf.mxu0
        %v765 = vadd.f32 0.0, %v764
        %v766 = vpop.f32.mrf.mxu0
        %v767 = vadd.f32 0.0, %v766
        %768 = vmatmul.bf16.gmra.mxu0 %v727
        %v769 = vpop.f32.mrf.mxu0
        %v770 = vadd.f32 0.0, %v769
        %v771 = vpop.f32.mrf.mxu0
        %v772 = vadd.f32 0.0, %v771
        %773 = vmatmul.bf16.gmra.mxu0 %v730
        %v774 = vpop.f32.mrf.mxu0
        %v775 = vadd.f32 0.0, %v774
        %v776 = vpop.f32.mrf.mxu0
        %v777 = vadd.f32 0.0, %v776
        %778 = vmatmul.bf16.gmra.mxu0 %v733
        %v779 = vpop.f32.mrf.mxu0
        %v780 = vadd.f32 0.0, %v779
        %v781 = vpop.f32.mrf.mxu0
        %v782 = vadd.f32 0.0, %v781
        %783 = vdwg.mxu0
        %v800 = vunpack.c.l.b16 %v624
        %v801 = vunpack.c.l.b16 %v625
        %v802 = vunpack.c.l.b16 %v626
        %v803 = vunpack.c.l.b16 %v627
        %v804 = vunpack.c.l.b16 %v628
        %v805 = vunpack.c.l.b16 %v629
        %v806 = vunpack.c.l.b16 %v630
        %v807 = vunpack.c.l.b16 %v631
        %v808 = vunpack.c.l.b16 %v632
        %v809 = vunpack.c.l.b16 %v633
        %v810 = vunpack.c.l.b16 %v634
        %v811 = vunpack.c.l.b16 %v635
        %v812 = vunpack.c.l.b16 %v636
        %v813 = vunpack.c.l.b16 %v637
        %v814 = vunpack.c.l.b16 %v638
        %v815 = vunpack.c.l.b16 %v639
        %v816 = vpack.c.b16 %v801, %v800
        %v817 = vpack.c.b16 %v803, %v802
        %v818 = vpack.c.b16 %v805, %v804
        %v819 = vpack.c.b16 %v807, %v806
        %v820 = vpack.c.b16 %v809, %v808
        %v821 = vpack.c.b16 %v811, %v810
        %v822 = vpack.c.b16 %v813, %v812
        %v823 = vpack.c.b16 %v815, %v814
        %v826 = vunpack.c.l.b16 %v641
        %v827 = vunpack.c.l.b16 %v642
        %v828 = vpack.c.b16 %v827, %v826
        %v831 = vsel %vm317, %v816, 0
        %v834 = vsel %vm317, %v817, 0
        %v837 = vsel %vm317, %v818, 0
        %v840 = vsel %vm317, %v819, 0
        %v843 = vsel %vm317, %v820, 0
        %v846 = vsel %vm317, %v821, 0
        %v849 = vsel %vm317, %v822, 0
        %v852 = vsel %vm317, %v823, 0
        %854 = vmatpush.bf16.msra.mxu0 0
        %855 = vmatpush.bf16.msra.mxu0 0
        %856 = vmatpush.bf16.msra.mxu0 0
        %857 = vmatpush.bf16.msra.mxu0 0
        %858 = vmatpush.bf16.msra.mxu0 0
        %859 = vmatpush.bf16.msra.mxu0 0
        %860 = vmatpush.bf16.msra.mxu0 0
        %861 = vmatpush.bf16.msra.mxu0 %v828
        %862 = vmatmul.bf16.gmra.mxu0 %v831
        %v863 = vpop.f32.mrf.mxu0
        %v864 = vadd.f32 %v745, %v863
        %v865 = vpop.f32.mrf.mxu0
        %v866 = vadd.f32 %v747, %v865
        %867 = vmatmul.bf16.gmra.mxu0 %v834
        %v868 = vpop.f32.mrf.mxu0
        %v869 = vadd.f32 %v750, %v868
        %v870 = vpop.f32.mrf.mxu0
        %v871 = vadd.f32 %v752, %v870
        %872 = vmatmul.bf16.gmra.mxu0 %v837
        %v873 = vpop.f32.mrf.mxu0
        %v874 = vadd.f32 %v755, %v873
        %v875 = vpop.f32.mrf.mxu0
        %v876 = vadd.f32 %v757, %v875
        %877 = vmatmul.bf16.gmra.mxu0 %v840
        %v878 = vpop.f32.mrf.mxu0
        %v879 = vadd.f32 %v760, %v878
        %v880 = vpop.f32.mrf.mxu0
        %v881 = vadd.f32 %v762, %v880
        %882 = vmatmul.bf16.gmra.mxu0 %v843
        %v883 = vpop.f32.mrf.mxu0
        %v884 = vadd.f32 %v765, %v883
        %v885 = vpop.f32.mrf.mxu0
        %v886 = vadd.f32 %v767, %v885
        %887 = vmatmul.bf16.gmra.mxu0 %v846
        %v888 = vpop.f32.mrf.mxu0
        %v889 = vadd.f32 %v770, %v888
        %v890 = vpop.f32.mrf.mxu0
        %v891 = vadd.f32 %v772, %v890
        %892 = vmatmul.bf16.gmra.mxu0 %v849
        %v893 = vpop.f32.mrf.mxu0
        %v894 = vadd.f32 %v775, %v893
        %v895 = vpop.f32.mrf.mxu0
        %v896 = vadd.f32 %v777, %v895
        %897 = vmatmul.bf16.gmra.mxu0 %v852
        %v898 = vpop.f32.mrf.mxu0
        %v899 = vadd.f32 %v780, %v898
        %v900 = vpop.f32.mrf.mxu0
        %v901 = vadd.f32 %v782, %v900
        %902 = vdwg.mxu0
        %v903 = vadd.f32 %v864, %v511
        %v904 = vadd.f32 %v866, %v511
        %v905 = vadd.f32 %v869, %v511
        %v906 = vadd.f32 %v871, %v511
        %v907 = vadd.f32 %v874, %v511
        %v908 = vadd.f32 %v876, %v511
        %v909 = vadd.f32 %v879, %v511
        %v910 = vadd.f32 %v881, %v511
        %v911 = vadd.f32 %v884, %v511
        %v912 = vadd.f32 %v886, %v511
        %v913 = vadd.f32 %v889, %v511
        %v914 = vadd.f32 %v891, %v511
        %v915 = vadd.f32 %v894, %v511
        %v916 = vadd.f32 %v896, %v511
        %v917 = vadd.f32 %v899, %v511
        %v918 = vadd.f32 %v901, %v511
        %v919 = vpack.c.bf16 %v903, %v903
        %v920 = vpack.c.bf16 %v904, %v904
        %v921 = vpack.c.bf16 %v905, %v905
        %v922 = vpack.c.bf16 %v906, %v906
        %v923 = vpack.c.bf16 %v907, %v907
        %v924 = vpack.c.bf16 %v908, %v908
        %v925 = vpack.c.bf16 %v909, %v909
        %v926 = vpack.c.bf16 %v910, %v910
        %v927 = vpack.c.bf16 %v911, %v911
        %v928 = vpack.c.bf16 %v912, %v912
        %v929 = vpack.c.bf16 %v913, %v913
        %v930 = vpack.c.bf16 %v914, %v914
        %v931 = vpack.c.bf16 %v915, %v915
        %v932 = vpack.c.bf16 %v916, %v916
        %v933 = vpack.c.bf16 %v917, %v917
        %v934 = vpack.c.bf16 %v918, %v918
        %s935 = scalar_lea.vmem %s210, 64 [#allocation2]
        %936 = vst [vmem:[%s935] sm:$0xf] %v919
        %937 = vst [vmem:[%s935 + $0x4] sm:$0xf] %v920
        %938 = vst [vmem:[%s935 + $0x8] sm:$0xf] %v921
        %939 = vst [vmem:[%s935 + $0xc] sm:$0xf] %v922
        %940 = vst [vmem:[%s935 + $0x10] sm:$0xf] %v923
        %941 = vst [vmem:[%s935 + $0x14] sm:$0xf] %v924
        %942 = vst [vmem:[%s935 + $0x18] sm:$0xf] %v925
        %943 = vst [vmem:[%s935 + $0x1c] sm:$0xf] %v926
        %944 = vst [vmem:[%s935 + $0x20] sm:$0xf] %v927
        %945 = vst [vmem:[%s935 + $0x24] sm:$0xf] %v928
        %946 = vst [vmem:[%s935 + $0x28] sm:$0xf] %v929
        %947 = vst [vmem:[%s935 + $0x2c] sm:$0xf] %v930
        %948 = vst [vmem:[%s935 + $0x30] sm:$0xf] %v931
        %949 = vst [vmem:[%s935 + $0x34] sm:$0xf] %v932
        %950 = vst [vmem:[%s935 + $0x38] sm:$0xf] %v933
        %951 = vst [vmem:[%s935 + $0x3c] sm:$0xf] %v934
        %v952 = vadd.f32 %v903, %v904
        %v953 = vadd.f32 %v952, %v905
        %v954 = vadd.f32 %v953, %v906
        %v955 = vadd.f32 %v954, %v907
        %v956 = vadd.f32 %v955, %v908
        %v957 = vadd.f32 %v956, %v909
        %v958 = vadd.f32 %v957, %v910
        %v959 = vadd.f32 %v958, %v911
        %v960 = vadd.f32 %v959, %v912
        %v961 = vadd.f32 %v960, %v913
        %v962 = vadd.f32 %v961, %v914
        %v963 = vadd.f32 %v962, %v915
        %v964 = vadd.f32 %v963, %v916
        %v965 = vadd.f32 %v964, %v917
        %v966 = vadd.f32 %v965, %v918
        %v967 = vrot.slane %v966, 4
        %v968 = vadd.f32 %v966, %v967
        %v969 = vrot.slane %v968, 2
        %v970 = vadd.f32 %v968, %v969
        %v971 = vrot.slane %v970, 1
        %v972 = vadd.f32 %v970, %v971
        %v973 = vadd.f32 %v582, %v972
        %v974 = vmul.f32 %v903, %v903
        %v975 = vmul.f32 %v904, %v904
        %v976 = vmul.f32 %v905, %v905
        %v977 = vmul.f32 %v906, %v906
        %v978 = vmul.f32 %v907, %v907
        %v979 = vmul.f32 %v908, %v908
        %v980 = vmul.f32 %v909, %v909
        %v981 = vmul.f32 %v910, %v910
        %v982 = vmul.f32 %v911, %v911
        %v983 = vmul.f32 %v912, %v912
        %v984 = vmul.f32 %v913, %v913
        %v985 = vmul.f32 %v914, %v914
        %v986 = vmul.f32 %v915, %v915
        %v987 = vmul.f32 %v916, %v916
        %v988 = vmul.f32 %v917, %v917
        %v989 = vmul.f32 %v918, %v918
        %v990 = vadd.f32 %v974, %v975
        %v991 = vadd.f32 %v990, %v976
        %v992 = vadd.f32 %v991, %v977
        %v993 = vadd.f32 %v992, %v978
        %v994 = vadd.f32 %v993, %v979
        %v995 = vadd.f32 %v994, %v980
        %v996 = vadd.f32 %v995, %v981
        %v997 = vadd.f32 %v996, %v982
        %v998 = vadd.f32 %v997, %v983
        %v999 = vadd.f32 %v998, %v984
        %v1000 = vadd.f32 %v999, %v985
        %v1001 = vadd.f32 %v1000, %v986
        %v1002 = vadd.f32 %v1001, %v987
        %v1003 = vadd.f32 %v1002, %v988
        %v1004 = vadd.f32 %v1003, %v989
        %v1005 = vrot.slane %v1004, 4
        %v1006 = vadd.f32 %v1004, %v1005
        %v1007 = vrot.slane %v1006, 2
        %v1008 = vadd.f32 %v1006, %v1007
        %v1009 = vrot.slane %v1008, 1
        %v1010 = vadd.f32 %v1008, %v1009
        %v1011 = vadd.f32 %v620, %v1010
        %v1012 = vld [vmem:[%s251] sm:$0xf]
        %v1013 = vld [vmem:[%s251 + $0x4] sm:$0xf]
        %v1014 = vld [vmem:[%s251 + $0x8] sm:$0xf]
        %v1015 = vld [vmem:[%s251 + $0xc] sm:$0xf]
        %v1016 = vld [vmem:[%s251 + $0x10] sm:$0xf]
        %v1017 = vld [vmem:[%s251 + $0x14] sm:$0xf]
        %v1018 = vld [vmem:[%s251 + $0x18] sm:$0xf]
        %v1019 = vld [vmem:[%s251 + $0x1c] sm:$0xf]
        %v1020 = vld [vmem:[%s251 + $0x20] sm:$0xf]
        %v1021 = vld [vmem:[%s251 + $0x24] sm:$0xf]
        %v1022 = vld [vmem:[%s251 + $0x28] sm:$0xf]
        %v1023 = vld [vmem:[%s251 + $0x2c] sm:$0xf]
        %v1024 = vld [vmem:[%s251 + $0x30] sm:$0xf]
        %v1025 = vld [vmem:[%s251 + $0x34] sm:$0xf]
        %v1026 = vld [vmem:[%s251 + $0x38] sm:$0xf]
        %v1027 = vld [vmem:[%s251 + $0x3c] sm:$0xf]
        %s1028 = scalar_lea.vmem %s1, 32
        %v1029 = vld [vmem:[%s1028] sm:$0xf]
        %v1030 = vld [vmem:[%s1028 + $0x4] sm:$0xf]
        %s1031 = sadd.s32 %s226, 2
        %s1032 = smul.u32 %s1031, 2
        %s1033 = smul.addr %s1032, 4
        %s1034 = scalar_lea.vmem %s222, %s1033
        %v1035 = vld [vmem:[%s1034] sm:$0xf]
        %v1036 = vld [vmem:[%s1034 + $0x4] sm:$0xf]
        %v1037 = vld [vmem:[%s1034 + $0x8] sm:$0xf]
        %v1038 = vld [vmem:[%s1034 + $0xc] sm:$0xf]
        %v1039 = vld [vmem:[%s1034 + $0x10] sm:$0xf]
        %v1040 = vld [vmem:[%s1034 + $0x14] sm:$0xf]
        %v1041 = vld [vmem:[%s1034 + $0x18] sm:$0xf]
        %v1042 = vld [vmem:[%s1034 + $0x1c] sm:$0xf]
        %v1043 = vld [vmem:[%s1034 + $0x20] sm:$0xf]
        %v1044 = vld [vmem:[%s1034 + $0x24] sm:$0xf]
        %v1045 = vld [vmem:[%s1034 + $0x28] sm:$0xf]
        %v1046 = vld [vmem:[%s1034 + $0x2c] sm:$0xf]
        %v1047 = vld [vmem:[%s1034 + $0x30] sm:$0xf]
        %v1048 = vld [vmem:[%s1034 + $0x34] sm:$0xf]
        %v1049 = vld [vmem:[%s1034 + $0x38] sm:$0xf]
        %v1050 = vld [vmem:[%s1034 + $0x3c] sm:$0xf]
        %s1051 = scalar_lea.vmem %s1, 40
        %v1052 = vld [vmem:[%s1051] sm:$0xf]
        %v1053 = vld [vmem:[%s1051 + $0x4] sm:$0xf]
        %v1070 = vunpack.c.l.b16 %v1035
        %v1071 = vunpack.c.l.b16 %v1036
        %v1072 = vunpack.c.l.b16 %v1037
        %v1073 = vunpack.c.l.b16 %v1038
        %v1074 = vunpack.c.l.b16 %v1039
        %v1075 = vunpack.c.l.b16 %v1040
        %v1076 = vunpack.c.l.b16 %v1041
        %v1077 = vunpack.c.l.b16 %v1042
        %v1078 = vunpack.c.l.b16 %v1043
        %v1079 = vunpack.c.l.b16 %v1044
        %v1080 = vunpack.c.l.b16 %v1045
        %v1081 = vunpack.c.l.b16 %v1046
        %v1082 = vunpack.c.l.b16 %v1047
        %v1083 = vunpack.c.l.b16 %v1048
        %v1084 = vunpack.c.l.b16 %v1049
        %v1085 = vunpack.c.l.b16 %v1050
        %v1086 = vpack.c.b16 %v1071, %v1070
        %v1087 = vpack.c.b16 %v1073, %v1072
        %v1088 = vpack.c.b16 %v1075, %v1074
        %v1089 = vpack.c.b16 %v1077, %v1076
        %v1090 = vpack.c.b16 %v1079, %v1078
        %v1091 = vpack.c.b16 %v1081, %v1080
        %v1092 = vpack.c.b16 %v1083, %v1082
        %v1093 = vpack.c.b16 %v1085, %v1084
        %v1096 = vunpack.c.l.b16 %v1052
        %v1097 = vunpack.c.l.b16 %v1053
        %v1098 = vpack.c.b16 %v1097, %v1096
        %v1101 = vsel %vm317, %v1086, 0
        %v1104 = vsel %vm317, %v1087, 0
        %v1107 = vsel %vm317, %v1088, 0
        %v1110 = vsel %vm317, %v1089, 0
        %v1113 = vsel %vm317, %v1090, 0
        %v1116 = vsel %vm317, %v1091, 0
        %v1119 = vsel %vm317, %v1092, 0
        %v1122 = vsel %vm317, %v1093, 0
        %1124 = vmatpush.bf16.msra.mxu0 0
        %1125 = vmatpush.bf16.msra.mxu0 0
        %1126 = vmatpush.bf16.msra.mxu0 0
        %1127 = vmatpush.bf16.msra.mxu0 0
        %1128 = vmatpush.bf16.msra.mxu0 0
        %1129 = vmatpush.bf16.msra.mxu0 0
        %1130 = vmatpush.bf16.msra.mxu0 0
        %1131 = vmatpush.bf16.msra.mxu0 %v1098
        %1132 = vmatmul.bf16.gmra.mxu0 %v1101
        %v1133 = vpop.f32.mrf.mxu0
        %v1134 = vadd.f32 0.0, %v1133
        %v1135 = vpop.f32.mrf.mxu0
        %v1136 = vadd.f32 0.0, %v1135
        %1137 = vmatmul.bf16.gmra.mxu0 %v1104
        %v1138 = vpop.f32.mrf.mxu0
        %v1139 = vadd.f32 0.0, %v1138
        %v1140 = vpop.f32.mrf.mxu0
        %v1141 = vadd.f32 0.0, %v1140
        %1142 = vmatmul.bf16.gmra.mxu0 %v1107
        %v1143 = vpop.f32.mrf.mxu0
        %v1144 = vadd.f32 0.0, %v1143
        %v1145 = vpop.f32.mrf.mxu0
        %v1146 = vadd.f32 0.0, %v1145
        %1147 = vmatmul.bf16.gmra.mxu0 %v1110
        %v1148 = vpop.f32.mrf.mxu0
        %v1149 = vadd.f32 0.0, %v1148
        %v1150 = vpop.f32.mrf.mxu0
        %v1151 = vadd.f32 0.0, %v1150
        %1152 = vmatmul.bf16.gmra.mxu0 %v1113
        %v1153 = vpop.f32.mrf.mxu0
        %v1154 = vadd.f32 0.0, %v1153
        %v1155 = vpop.f32.mrf.mxu0
        %v1156 = vadd.f32 0.0, %v1155
        %1157 = vmatmul.bf16.gmra.mxu0 %v1116
        %v1158 = vpop.f32.mrf.mxu0
        %v1159 = vadd.f32 0.0, %v1158
        %v1160 = vpop.f32.mrf.mxu0
        %v1161 = vadd.f32 0.0, %v1160
        %1162 = vmatmul.bf16.gmra.mxu0 %v1119
        %v1163 = vpop.f32.mrf.mxu0
        %v1164 = vadd.f32 0.0, %v1163
        %v1165 = vpop.f32.mrf.mxu0
        %v1166 = vadd.f32 0.0, %v1165
        %1167 = vmatmul.bf16.gmra.mxu0 %v1122
        %v1168 = vpop.f32.mrf.mxu0
        %v1169 = vadd.f32 0.0, %v1168
        %v1170 = vpop.f32.mrf.mxu0
        %v1171 = vadd.f32 0.0, %v1170
        %1172 = vdwg.mxu0
        %v1189 = vunpack.c.l.b16 %v1012
        %v1190 = vunpack.c.l.b16 %v1013
        %v1191 = vunpack.c.l.b16 %v1014
        %v1192 = vunpack.c.l.b16 %v1015
        %v1193 = vunpack.c.l.b16 %v1016
        %v1194 = vunpack.c.l.b16 %v1017
        %v1195 = vunpack.c.l.b16 %v1018
        %v1196 = vunpack.c.l.b16 %v1019
        %v1197 = vunpack.c.l.b16 %v1020
        %v1198 = vunpack.c.l.b16 %v1021
        %v1199 = vunpack.c.l.b16 %v1022
        %v1200 = vunpack.c.l.b16 %v1023
        %v1201 = vunpack.c.l.b16 %v1024
        %v1202 = vunpack.c.l.b16 %v1025
        %v1203 = vunpack.c.l.b16 %v1026
        %v1204 = vunpack.c.l.b16 %v1027
        %v1205 = vpack.c.b16 %v1190, %v1189
        %v1206 = vpack.c.b16 %v1192, %v1191
        %v1207 = vpack.c.b16 %v1194, %v1193
        %v1208 = vpack.c.b16 %v1196, %v1195
        %v1209 = vpack.c.b16 %v1198, %v1197
        %v1210 = vpack.c.b16 %v1200, %v1199
        %v1211 = vpack.c.b16 %v1202, %v1201
        %v1212 = vpack.c.b16 %v1204, %v1203
        %v1215 = vunpack.c.l.b16 %v1029
        %v1216 = vunpack.c.l.b16 %v1030
        %v1217 = vpack.c.b16 %v1216, %v1215
        %v1220 = vsel %vm317, %v1205, 0
        %v1223 = vsel %vm317, %v1206, 0
        %v1226 = vsel %vm317, %v1207, 0
        %v1229 = vsel %vm317, %v1208, 0
        %v1232 = vsel %vm317, %v1209, 0
        %v1235 = vsel %vm317, %v1210, 0
        %v1238 = vsel %vm317, %v1211, 0
        %v1241 = vsel %vm317, %v1212, 0
        %1243 = vmatpush.bf16.msra.mxu0 0
        %1244 = vmatpush.bf16.msra.mxu0 0
        %1245 = vmatpush.bf16.msra.mxu0 0
        %1246 = vmatpush.bf16.msra.mxu0 0
        %1247 = vmatpush.bf16.msra.mxu0 0
        %1248 = vmatpush.bf16.msra.mxu0 0
        %1249 = vmatpush.bf16.msra.mxu0 0
        %1250 = vmatpush.bf16.msra.mxu0 %v1217
        %1251 = vmatmul.bf16.gmra.mxu0 %v1220
        %v1252 = vpop.f32.mrf.mxu0
        %v1253 = vadd.f32 %v1134, %v1252
        %v1254 = vpop.f32.mrf.mxu0
        %v1255 = vadd.f32 %v1136, %v1254
        %1256 = vmatmul.bf16.gmra.mxu0 %v1223
        %v1257 = vpop.f32.mrf.mxu0
        %v1258 = vadd.f32 %v1139, %v1257
        %v1259 = vpop.f32.mrf.mxu0
        %v1260 = vadd.f32 %v1141, %v1259
        %1261 = vmatmul.bf16.gmra.mxu0 %v1226
        %v1262 = vpop.f32.mrf.mxu0
        %v1263 = vadd.f32 %v1144, %v1262
        %v1264 = vpop.f32.mrf.mxu0
        %v1265 = vadd.f32 %v1146, %v1264
        %1266 = vmatmul.bf16.gmra.mxu0 %v1229
        %v1267 = vpop.f32.mrf.mxu0
        %v1268 = vadd.f32 %v1149, %v1267
        %v1269 = vpop.f32.mrf.mxu0
        %v1270 = vadd.f32 %v1151, %v1269
        %1271 = vmatmul.bf16.gmra.mxu0 %v1232
        %v1272 = vpop.f32.mrf.mxu0
        %v1273 = vadd.f32 %v1154, %v1272
        %v1274 = vpop.f32.mrf.mxu0
        %v1275 = vadd.f32 %v1156, %v1274
        %1276 = vmatmul.bf16.gmra.mxu0 %v1235
        %v1277 = vpop.f32.mrf.mxu0
        %v1278 = vadd.f32 %v1159, %v1277
        %v1279 = vpop.f32.mrf.mxu0
        %v1280 = vadd.f32 %v1161, %v1279
        %1281 = vmatmul.bf16.gmra.mxu0 %v1238
        %v1282 = vpop.f32.mrf.mxu0
        %v1283 = vadd.f32 %v1164, %v1282
        %v1284 = vpop.f32.mrf.mxu0
        %v1285 = vadd.f32 %v1166, %v1284
        %1286 = vmatmul.bf16.gmra.mxu0 %v1241
        %v1287 = vpop.f32.mrf.mxu0
        %v1288 = vadd.f32 %v1169, %v1287
        %v1289 = vpop.f32.mrf.mxu0
        %v1290 = vadd.f32 %v1171, %v1289
        %1291 = vdwg.mxu0
        %v1292 = vadd.f32 %v1253, %v511
        %v1293 = vadd.f32 %v1255, %v511
        %v1294 = vadd.f32 %v1258, %v511
        %v1295 = vadd.f32 %v1260, %v511
        %v1296 = vadd.f32 %v1263, %v511
        %v1297 = vadd.f32 %v1265, %v511
        %v1298 = vadd.f32 %v1268, %v511
        %v1299 = vadd.f32 %v1270, %v511
        %v1300 = vadd.f32 %v1273, %v511
        %v1301 = vadd.f32 %v1275, %v511
        %v1302 = vadd.f32 %v1278, %v511
        %v1303 = vadd.f32 %v1280, %v511
        %v1304 = vadd.f32 %v1283, %v511
        %v1305 = vadd.f32 %v1285, %v511
        %v1306 = vadd.f32 %v1288, %v511
        %v1307 = vadd.f32 %v1290, %v511
        %v1308 = vpack.c.bf16 %v1292, %v1292
        %v1309 = vpack.c.bf16 %v1293, %v1293
        %v1310 = vpack.c.bf16 %v1294, %v1294
        %v1311 = vpack.c.bf16 %v1295, %v1295
        %v1312 = vpack.c.bf16 %v1296, %v1296
        %v1313 = vpack.c.bf16 %v1297, %v1297
        %v1314 = vpack.c.bf16 %v1298, %v1298
        %v1315 = vpack.c.bf16 %v1299, %v1299
        %v1316 = vpack.c.bf16 %v1300, %v1300
        %v1317 = vpack.c.bf16 %v1301, %v1301
        %v1318 = vpack.c.bf16 %v1302, %v1302
        %v1319 = vpack.c.bf16 %v1303, %v1303
        %v1320 = vpack.c.bf16 %v1304, %v1304
        %v1321 = vpack.c.bf16 %v1305, %v1305
        %v1322 = vpack.c.bf16 %v1306, %v1306
        %v1323 = vpack.c.bf16 %v1307, %v1307
        %s1324 = scalar_lea.vmem %s210, 128 [#allocation2]
        %1325 = vst [vmem:[%s1324] sm:$0xf] %v1308
        %1326 = vst [vmem:[%s1324 + $0x4] sm:$0xf] %v1309
        %1327 = vst [vmem:[%s1324 + $0x8] sm:$0xf] %v1310
        %1328 = vst [vmem:[%s1324 + $0xc] sm:$0xf] %v1311
        %1329 = vst [vmem:[%s1324 + $0x10] sm:$0xf] %v1312
        %1330 = vst [vmem:[%s1324 + $0x14] sm:$0xf] %v1313
        %1331 = vst [vmem:[%s1324 + $0x18] sm:$0xf] %v1314
        %1332 = vst [vmem:[%s1324 + $0x1c] sm:$0xf] %v1315
        %1333 = vst [vmem:[%s1324 + $0x20] sm:$0xf] %v1316
        %1334 = vst [vmem:[%s1324 + $0x24] sm:$0xf] %v1317
        %1335 = vst [vmem:[%s1324 + $0x28] sm:$0xf] %v1318
        %1336 = vst [vmem:[%s1324 + $0x2c] sm:$0xf] %v1319
        %1337 = vst [vmem:[%s1324 + $0x30] sm:$0xf] %v1320
        %1338 = vst [vmem:[%s1324 + $0x34] sm:$0xf] %v1321
        %1339 = vst [vmem:[%s1324 + $0x38] sm:$0xf] %v1322
        %1340 = vst [vmem:[%s1324 + $0x3c] sm:$0xf] %v1323
        %v1341 = vadd.f32 %v1292, %v1293
        %v1342 = vadd.f32 %v1341, %v1294
        %v1343 = vadd.f32 %v1342, %v1295
        %v1344 = vadd.f32 %v1343, %v1296
        %v1345 = vadd.f32 %v1344, %v1297
        %v1346 = vadd.f32 %v1345, %v1298
        %v1347 = vadd.f32 %v1346, %v1299
        %v1348 = vadd.f32 %v1347, %v1300
        %v1349 = vadd.f32 %v1348, %v1301
        %v1350 = vadd.f32 %v1349, %v1302
        %v1351 = vadd.f32 %v1350, %v1303
        %v1352 = vadd.f32 %v1351, %v1304
        %v1353 = vadd.f32 %v1352, %v1305
        %v1354 = vadd.f32 %v1353, %v1306
        %v1355 = vadd.f32 %v1354, %v1307
        %v1356 = vrot.slane %v1355, 4
        %v1357 = vadd.f32 %v1355, %v1356
        %v1358 = vrot.slane %v1357, 2
        %v1359 = vadd.f32 %v1357, %v1358
        %v1360 = vrot.slane %v1359, 1
        %v1361 = vadd.f32 %v1359, %v1360
        %v1362 = vadd.f32 %v973, %v1361
        %v1363 = vmul.f32 %v1292, %v1292
        %v1364 = vmul.f32 %v1293, %v1293
        %v1365 = vmul.f32 %v1294, %v1294
        %v1366 = vmul.f32 %v1295, %v1295
        %v1367 = vmul.f32 %v1296, %v1296
        %v1368 = vmul.f32 %v1297, %v1297
        %v1369 = vmul.f32 %v1298, %v1298
        %v1370 = vmul.f32 %v1299, %v1299
        %v1371 = vmul.f32 %v1300, %v1300
        %v1372 = vmul.f32 %v1301, %v1301
        %v1373 = vmul.f32 %v1302, %v1302
        %v1374 = vmul.f32 %v1303, %v1303
        %v1375 = vmul.f32 %v1304, %v1304
        %v1376 = vmul.f32 %v1305, %v1305
        %v1377 = vmul.f32 %v1306, %v1306
        %v1378 = vmul.f32 %v1307, %v1307
        %v1379 = vadd.f32 %v1363, %v1364
        %v1380 = vadd.f32 %v1379, %v1365
        %v1381 = vadd.f32 %v1380, %v1366
        %v1382 = vadd.f32 %v1381, %v1367
        %v1383 = vadd.f32 %v1382, %v1368
        %v1384 = vadd.f32 %v1383, %v1369
        %v1385 = vadd.f32 %v1384, %v1370
        %v1386 = vadd.f32 %v1385, %v1371
        %v1387 = vadd.f32 %v1386, %v1372
        %v1388 = vadd.f32 %v1387, %v1373
        %v1389 = vadd.f32 %v1388, %v1374
        %v1390 = vadd.f32 %v1389, %v1375
        %v1391 = vadd.f32 %v1390, %v1376
        %v1392 = vadd.f32 %v1391, %v1377
        %v1393 = vadd.f32 %v1392, %v1378
        %v1394 = vrot.slane %v1393, 4
        %v1395 = vadd.f32 %v1393, %v1394
        %v1396 = vrot.slane %v1395, 2
        %v1397 = vadd.f32 %v1395, %v1396
        %v1398 = vrot.slane %v1397, 1
        %v1399 = vadd.f32 %v1397, %v1398
        %v1400 = vadd.f32 %v1011, %v1399
        %v1401 = vld [vmem:[%s645] sm:$0xf]
        %v1402 = vld [vmem:[%s645 + $0x4] sm:$0xf]
        %v1403 = vld [vmem:[%s645 + $0x8] sm:$0xf]
        %v1404 = vld [vmem:[%s645 + $0xc] sm:$0xf]
        %v1405 = vld [vmem:[%s645 + $0x10] sm:$0xf]
        %v1406 = vld [vmem:[%s645 + $0x14] sm:$0xf]
        %v1407 = vld [vmem:[%s645 + $0x18] sm:$0xf]
        %v1408 = vld [vmem:[%s645 + $0x1c] sm:$0xf]
        %v1409 = vld [vmem:[%s645 + $0x20] sm:$0xf]
        %v1410 = vld [vmem:[%s645 + $0x24] sm:$0xf]
        %v1411 = vld [vmem:[%s645 + $0x28] sm:$0xf]
        %v1412 = vld [vmem:[%s645 + $0x2c] sm:$0xf]
        %v1413 = vld [vmem:[%s645 + $0x30] sm:$0xf]
        %v1414 = vld [vmem:[%s645 + $0x34] sm:$0xf]
        %v1415 = vld [vmem:[%s645 + $0x38] sm:$0xf]
        %v1416 = vld [vmem:[%s645 + $0x3c] sm:$0xf]
        %s1417 = scalar_lea.vmem %s1, 48
        %v1418 = vld [vmem:[%s1417] sm:$0xf]
        %v1419 = vld [vmem:[%s1417 + $0x4] sm:$0xf]
        %s1420 = sadd.s32 %s1032, 36
        %s1421 = smul.addr %s1420, 4
        %s1422 = scalar_lea.vmem %s222, %s1421
        %v1423 = vld [vmem:[%s1422] sm:$0xf]
        %v1424 = vld [vmem:[%s1422 + $0x4] sm:$0xf]
        %v1425 = vld [vmem:[%s1422 + $0x8] sm:$0xf]
        %v1426 = vld [vmem:[%s1422 + $0xc] sm:$0xf]
        %v1427 = vld [vmem:[%s1422 + $0x10] sm:$0xf]
        %v1428 = vld [vmem:[%s1422 + $0x14] sm:$0xf]
        %v1429 = vld [vmem:[%s1422 + $0x18] sm:$0xf]
        %v1430 = vld [vmem:[%s1422 + $0x1c] sm:$0xf]
        %v1431 = vld [vmem:[%s1422 + $0x20] sm:$0xf]
        %v1432 = vld [vmem:[%s1422 + $0x24] sm:$0xf]
        %v1433 = vld [vmem:[%s1422 + $0x28] sm:$0xf]
        %v1434 = vld [vmem:[%s1422 + $0x2c] sm:$0xf]
        %v1435 = vld [vmem:[%s1422 + $0x30] sm:$0xf]
        %v1436 = vld [vmem:[%s1422 + $0x34] sm:$0xf]
        %v1437 = vld [vmem:[%s1422 + $0x38] sm:$0xf]
        %v1438 = vld [vmem:[%s1422 + $0x3c] sm:$0xf]
        %s1439 = scalar_lea.vmem %s1, 56
        %v1440 = vld [vmem:[%s1439] sm:$0xf]
        %v1441 = vld [vmem:[%s1439 + $0x4] sm:$0xf]
        %v1458 = vunpack.c.l.b16 %v1423
        %v1459 = vunpack.c.l.b16 %v1424
        %v1460 = vunpack.c.l.b16 %v1425
        %v1461 = vunpack.c.l.b16 %v1426
        %v1462 = vunpack.c.l.b16 %v1427
        %v1463 = vunpack.c.l.b16 %v1428
        %v1464 = vunpack.c.l.b16 %v1429
        %v1465 = vunpack.c.l.b16 %v1430
        %v1466 = vunpack.c.l.b16 %v1431
        %v1467 = vunpack.c.l.b16 %v1432
        %v1468 = vunpack.c.l.b16 %v1433
        %v1469 = vunpack.c.l.b16 %v1434
        %v1470 = vunpack.c.l.b16 %v1435
        %v1471 = vunpack.c.l.b16 %v1436
        %v1472 = vunpack.c.l.b16 %v1437
        %v1473 = vunpack.c.l.b16 %v1438
        %v1474 = vpack.c.b16 %v1459, %v1458
        %v1475 = vpack.c.b16 %v1461, %v1460
        %v1476 = vpack.c.b16 %v1463, %v1462
        %v1477 = vpack.c.b16 %v1465, %v1464
        %v1478 = vpack.c.b16 %v1467, %v1466
        %v1479 = vpack.c.b16 %v1469, %v1468
        %v1480 = vpack.c.b16 %v1471, %v1470
        %v1481 = vpack.c.b16 %v1473, %v1472
        %v1484 = vunpack.c.l.b16 %v1440
        %v1485 = vunpack.c.l.b16 %v1441
        %v1486 = vpack.c.b16 %v1485, %v1484
        %v1489 = vsel %vm317, %v1474, 0
        %v1492 = vsel %vm317, %v1475, 0
        %v1495 = vsel %vm317, %v1476, 0
        %v1498 = vsel %vm317, %v1477, 0
        %v1501 = vsel %vm317, %v1478, 0
        %v1504 = vsel %vm317, %v1479, 0
        %v1507 = vsel %vm317, %v1480, 0
        %v1510 = vsel %vm317, %v1481, 0
        %1512 = vmatpush.bf16.msra.mxu0 0
        %1513 = vmatpush.bf16.msra.mxu0 0
        %1514 = vmatpush.bf16.msra.mxu0 0
        %1515 = vmatpush.bf16.msra.mxu0 0
        %1516 = vmatpush.bf16.msra.mxu0 0
        %1517 = vmatpush.bf16.msra.mxu0 0
        %1518 = vmatpush.bf16.msra.mxu0 0
        %1519 = vmatpush.bf16.msra.mxu0 %v1486
        %1520 = vmatmul.bf16.gmra.mxu0 %v1489
        %v1521 = vpop.f32.mrf.mxu0
        %v1522 = vadd.f32 0.0, %v1521
        %v1523 = vpop.f32.mrf.mxu0
        %v1524 = vadd.f32 0.0, %v1523
        %1525 = vmatmul.bf16.gmra.mxu0 %v1492
        %v1526 = vpop.f32.mrf.mxu0
        %v1527 = vadd.f32 0.0, %v1526
        %v1528 = vpop.f32.mrf.mxu0
        %v1529 = vadd.f32 0.0, %v1528
        %1530 = vmatmul.bf16.gmra.mxu0 %v1495
        %v1531 = vpop.f32.mrf.mxu0
        %v1532 = vadd.f32 0.0, %v1531
        %v1533 = vpop.f32.mrf.mxu0
        %v1534 = vadd.f32 0.0, %v1533
        %1535 = vmatmul.bf16.gmra.mxu0 %v1498
        %v1536 = vpop.f32.mrf.mxu0
        %v1537 = vadd.f32 0.0, %v1536
        %v1538 = vpop.f32.mrf.mxu0
        %v1539 = vadd.f32 0.0, %v1538
        %1540 = vmatmul.bf16.gmra.mxu0 %v1501
        %v1541 = vpop.f32.mrf.mxu0
        %v1542 = vadd.f32 0.0, %v1541
        %v1543 = vpop.f32.mrf.mxu0
        %v1544 = vadd.f32 0.0, %v1543
        %1545 = vmatmul.bf16.gmra.mxu0 %v1504
        %v1546 = vpop.f32.mrf.mxu0
        %v1547 = vadd.f32 0.0, %v1546
        %v1548 = vpop.f32.mrf.mxu0
        %v1549 = vadd.f32 0.0, %v1548
        %1550 = vmatmul.bf16.gmra.mxu0 %v1507
        %v1551 = vpop.f32.mrf.mxu0
        %v1552 = vadd.f32 0.0, %v1551
        %v1553 = vpop.f32.mrf.mxu0
        %v1554 = vadd.f32 0.0, %v1553
        %1555 = vmatmul.bf16.gmra.mxu0 %v1510
        %v1556 = vpop.f32.mrf.mxu0
        %v1557 = vadd.f32 0.0, %v1556
        %v1558 = vpop.f32.mrf.mxu0
        %v1559 = vadd.f32 0.0, %v1558
        %1560 = vdwg.mxu0
        %v1577 = vunpack.c.l.b16 %v1401
        %v1578 = vunpack.c.l.b16 %v1402
        %v1579 = vunpack.c.l.b16 %v1403
        %v1580 = vunpack.c.l.b16 %v1404
        %v1581 = vunpack.c.l.b16 %v1405
        %v1582 = vunpack.c.l.b16 %v1406
        %v1583 = vunpack.c.l.b16 %v1407
        %v1584 = vunpack.c.l.b16 %v1408
        %v1585 = vunpack.c.l.b16 %v1409
        %v1586 = vunpack.c.l.b16 %v1410
        %v1587 = vunpack.c.l.b16 %v1411
        %v1588 = vunpack.c.l.b16 %v1412
        %v1589 = vunpack.c.l.b16 %v1413
        %v1590 = vunpack.c.l.b16 %v1414
        %v1591 = vunpack.c.l.b16 %v1415
        %v1592 = vunpack.c.l.b16 %v1416
        %v1593 = vpack.c.b16 %v1578, %v1577
        %v1594 = vpack.c.b16 %v1580, %v1579
        %v1595 = vpack.c.b16 %v1582, %v1581
        %v1596 = vpack.c.b16 %v1584, %v1583
        %v1597 = vpack.c.b16 %v1586, %v1585
        %v1598 = vpack.c.b16 %v1588, %v1587
        %v1599 = vpack.c.b16 %v1590, %v1589
        %v1600 = vpack.c.b16 %v1592, %v1591
        %v1603 = vunpack.c.l.b16 %v1418
        %v1604 = vunpack.c.l.b16 %v1419
        %v1605 = vpack.c.b16 %v1604, %v1603
        %v1608 = vsel %vm317, %v1593, 0
        %v1611 = vsel %vm317, %v1594, 0
        %v1614 = vsel %vm317, %v1595, 0
        %v1617 = vsel %vm317, %v1596, 0
        %v1620 = vsel %vm317, %v1597, 0
        %v1623 = vsel %vm317, %v1598, 0
        %v1626 = vsel %vm317, %v1599, 0
        %v1629 = vsel %vm317, %v1600, 0
        %1631 = vmatpush.bf16.msra.mxu0 0
        %1632 = vmatpush.bf16.msra.mxu0 0
        %1633 = vmatpush.bf16.msra.mxu0 0
        %1634 = vmatpush.bf16.msra.mxu0 0
        %1635 = vmatpush.bf16.msra.mxu0 0
        %1636 = vmatpush.bf16.msra.mxu0 0
        %1637 = vmatpush.bf16.msra.mxu0 0
        %1638 = vmatpush.bf16.msra.mxu0 %v1605
        %1639 = vmatmul.bf16.gmra.mxu0 %v1608
        %v1640 = vpop.f32.mrf.mxu0
        %v1641 = vadd.f32 %v1522, %v1640
        %v1642 = vpop.f32.mrf.mxu0
        %v1643 = vadd.f32 %v1524, %v1642
        %1644 = vmatmul.bf16.gmra.mxu0 %v1611
        %v1645 = vpop.f32.mrf.mxu0
        %v1646 = vadd.f32 %v1527, %v1645
        %v1647 = vpop.f32.mrf.mxu0
        %v1648 = vadd.f32 %v1529, %v1647
        %1649 = vmatmul.bf16.gmra.mxu0 %v1614
        %v1650 = vpop.f32.mrf.mxu0
        %v1651 = vadd.f32 %v1532, %v1650
        %v1652 = vpop.f32.mrf.mxu0
        %v1653 = vadd.f32 %v1534, %v1652
        %1654 = vmatmul.bf16.gmra.mxu0 %v1617
        %v1655 = vpop.f32.mrf.mxu0
        %v1656 = vadd.f32 %v1537, %v1655
        %v1657 = vpop.f32.mrf.mxu0
        %v1658 = vadd.f32 %v1539, %v1657
        %1659 = vmatmul.bf16.gmra.mxu0 %v1620
        %v1660 = vpop.f32.mrf.mxu0
        %v1661 = vadd.f32 %v1542, %v1660
        %v1662 = vpop.f32.mrf.mxu0
        %v1663 = vadd.f32 %v1544, %v1662
        %1664 = vmatmul.bf16.gmra.mxu0 %v1623
        %v1665 = vpop.f32.mrf.mxu0
        %v1666 = vadd.f32 %v1547, %v1665
        %v1667 = vpop.f32.mrf.mxu0
        %v1668 = vadd.f32 %v1549, %v1667
        %1669 = vmatmul.bf16.gmra.mxu0 %v1626
        %v1670 = vpop.f32.mrf.mxu0
        %v1671 = vadd.f32 %v1552, %v1670
        %v1672 = vpop.f32.mrf.mxu0
        %v1673 = vadd.f32 %v1554, %v1672
        %1674 = vmatmul.bf16.gmra.mxu0 %v1629
        %v1675 = vpop.f32.mrf.mxu0
        %v1676 = vadd.f32 %v1557, %v1675
        %v1677 = vpop.f32.mrf.mxu0
        %v1678 = vadd.f32 %v1559, %v1677
        %1679 = vdwg.mxu0
        %v1680 = vadd.f32 %v1641, %v511
        %v1681 = vadd.f32 %v1643, %v511
        %v1682 = vadd.f32 %v1646, %v511
        %v1683 = vadd.f32 %v1648, %v511
        %v1684 = vadd.f32 %v1651, %v511
        %v1685 = vadd.f32 %v1653, %v511
        %v1686 = vadd.f32 %v1656, %v511
        %v1687 = vadd.f32 %v1658, %v511
        %v1688 = vadd.f32 %v1661, %v511
        %v1689 = vadd.f32 %v1663, %v511
        %v1690 = vadd.f32 %v1666, %v511
        %v1691 = vadd.f32 %v1668, %v511
        %v1692 = vadd.f32 %v1671, %v511
        %v1693 = vadd.f32 %v1673, %v511
        %v1694 = vadd.f32 %v1676, %v511
        %v1695 = vadd.f32 %v1678, %v511
        %v1696 = vpack.c.bf16 %v1680, %v1680
        %v1697 = vpack.c.bf16 %v1681, %v1681
        %v1698 = vpack.c.bf16 %v1682, %v1682
        %v1699 = vpack.c.bf16 %v1683, %v1683
        %v1700 = vpack.c.bf16 %v1684, %v1684
        %v1701 = vpack.c.bf16 %v1685, %v1685
        %v1702 = vpack.c.bf16 %v1686, %v1686
        %v1703 = vpack.c.bf16 %v1687, %v1687
        %v1704 = vpack.c.bf16 %v1688, %v1688
        %v1705 = vpack.c.bf16 %v1689, %v1689
        %v1706 = vpack.c.bf16 %v1690, %v1690
        %v1707 = vpack.c.bf16 %v1691, %v1691
        %v1708 = vpack.c.bf16 %v1692, %v1692
        %v1709 = vpack.c.bf16 %v1693, %v1693
        %v1710 = vpack.c.bf16 %v1694, %v1694
        %v1711 = vpack.c.bf16 %v1695, %v1695
        %s1712 = scalar_lea.vmem %s210, 192 [#allocation2]
        %1713 = vst [vmem:[%s1712] sm:$0xf] %v1696
        %1714 = vst [vmem:[%s1712 + $0x4] sm:$0xf] %v1697
        %1715 = vst [vmem:[%s1712 + $0x8] sm:$0xf] %v1698
        %1716 = vst [vmem:[%s1712 + $0xc] sm:$0xf] %v1699
        %1717 = vst [vmem:[%s1712 + $0x10] sm:$0xf] %v1700
        %1718 = vst [vmem:[%s1712 + $0x14] sm:$0xf] %v1701
        %1719 = vst [vmem:[%s1712 + $0x18] sm:$0xf] %v1702
        %1720 = vst [vmem:[%s1712 + $0x1c] sm:$0xf] %v1703
        %1721 = vst [vmem:[%s1712 + $0x20] sm:$0xf] %v1704
        %1722 = vst [vmem:[%s1712 + $0x24] sm:$0xf] %v1705
        %1723 = vst [vmem:[%s1712 + $0x28] sm:$0xf] %v1706
        %1724 = vst [vmem:[%s1712 + $0x2c] sm:$0xf] %v1707
        %1725 = vst [vmem:[%s1712 + $0x30] sm:$0xf] %v1708
        %1726 = vst [vmem:[%s1712 + $0x34] sm:$0xf] %v1709
        %1727 = vst [vmem:[%s1712 + $0x38] sm:$0xf] %v1710
        %1728 = vst [vmem:[%s1712 + $0x3c] sm:$0xf] %v1711
        %v1729 = vadd.f32 %v1680, %v1681
        %v1730 = vadd.f32 %v1729, %v1682
        %v1731 = vadd.f32 %v1730, %v1683
        %v1732 = vadd.f32 %v1731, %v1684
        %v1733 = vadd.f32 %v1732, %v1685
        %v1734 = vadd.f32 %v1733, %v1686
        %v1735 = vadd.f32 %v1734, %v1687
        %v1736 = vadd.f32 %v1735, %v1688
        %v1737 = vadd.f32 %v1736, %v1689
        %v1738 = vadd.f32 %v1737, %v1690
        %v1739 = vadd.f32 %v1738, %v1691
        %v1740 = vadd.f32 %v1739, %v1692
        %v1741 = vadd.f32 %v1740, %v1693
        %v1742 = vadd.f32 %v1741, %v1694
        %v1743 = vadd.f32 %v1742, %v1695
        %v1744 = vrot.slane %v1743, 4
        %v1745 = vadd.f32 %v1743, %v1744
        %v1746 = vrot.slane %v1745, 2
        %v1747 = vadd.f32 %v1745, %v1746
        %v1748 = vrot.slane %v1747, 1
        %v1749 = vadd.f32 %v1747, %v1748
        %v1750 = vadd.f32 %v1362, %v1749
        %v1751 = vmul.f32 %v1680, %v1680
        %v1752 = vmul.f32 %v1681, %v1681
        %v1753 = vmul.f32 %v1682, %v1682
        %v1754 = vmul.f32 %v1683, %v1683
        %v1755 = vmul.f32 %v1684, %v1684
        %v1756 = vmul.f32 %v1685, %v1685
        %v1757 = vmul.f32 %v1686, %v1686
        %v1758 = vmul.f32 %v1687, %v1687
        %v1759 = vmul.f32 %v1688, %v1688
        %v1760 = vmul.f32 %v1689, %v1689
        %v1761 = vmul.f32 %v1690, %v1690
        %v1762 = vmul.f32 %v1691, %v1691
        %v1763 = vmul.f32 %v1692, %v1692
        %v1764 = vmul.f32 %v1693, %v1693
        %v1765 = vmul.f32 %v1694, %v1694
        %v1766 = vmul.f32 %v1695, %v1695
        %v1767 = vadd.f32 %v1751, %v1752
        %v1768 = vadd.f32 %v1767, %v1753
        %v1769 = vadd.f32 %v1768, %v1754
        %v1770 = vadd.f32 %v1769, %v1755
        %v1771 = vadd.f32 %v1770, %v1756
        %v1772 = vadd.f32 %v1771, %v1757
        %v1773 = vadd.f32 %v1772, %v1758
        %v1774 = vadd.f32 %v1773, %v1759
        %v1775 = vadd.f32 %v1774, %v1760
        %v1776 = vadd.f32 %v1775, %v1761
        %v1777 = vadd.f32 %v1776, %v1762
        %v1778 = vadd.f32 %v1777, %v1763
        %v1779 = vadd.f32 %v1778, %v1764
        %v1780 = vadd.f32 %v1779, %v1765
        %v1781 = vadd.f32 %v1780, %v1766
        %v1782 = vrot.slane %v1781, 4
        %v1783 = vadd.f32 %v1781, %v1782
        %v1784 = vrot.slane %v1783, 2
        %v1785 = vadd.f32 %v1783, %v1784
        %v1786 = vrot.slane %v1785, 1
        %v1787 = vadd.f32 %v1785, %v1786
        %v1788 = vadd.f32 %v1400, %v1787
        %1789 = vst [vmem:[%s217] sm:$0x1] %v1750
        %1790 = vst [vmem:[%s217 + $0x1] sm:$0x1] %v1788
        %s1791 = sand.u32 %s112, 1
        %s1792 = scalar_lea.sflag [#allocation3], %s1791
        %s1793 = sand.u32 %s112, 1
        %s1794 = smul.addr %s1793, 256
        %s1795 = scalar_lea.vmem [#allocation2], %s1794
        %s1796 = sand.u32 %s140, 1
        %s1797 = scalar_lea.sflag [#allocation5], %s1796
        %s1798 = sand.u32 %s140, 1
        %s1799 = smul.addr %s1798, 2
        %s1800 = scalar_lea.vmem [#allocation4], %s1799
        // Predicated region
        $region33: #{tpu_custom_call.1} parent=31 // pred_check
          %p1801 = pneg %p122
        $region34: #{tpu_custom_call.1} parent=31 // pred_check_branch
          %1803 = sbr.rel (%p1801) target = $region36
        $region35: #{tpu_custom_call.1} parent=31 // pred_region
          #allocation7 [shape = 'u32[6]{0}', space=smem, size = 0x18, scoped, tag = 'DMA stride descriptor']
          %s1804 = smul.u32 16, %s27
          %1806 = vsyncadd %s1792, 0
          %s1807 = smul.addr %s26, 128
          %s1808 = sadd.s32 %s1804, %s1807
          %s1809 = smul.addr %s1808, 4
          %s1810 = scalar_lea.hbm %s3, %s1809
          %s1812 = sshll.u32 1, 14
          %s1813 = sxor.u32 4294967295, %s1812
          %s1816 = sshll.u32 7, 18
          %s1817 = sxor.u32 4294967295, %s1816
          %s1818 = sand.u32 0, %s1817
          %s1820 = sor.u32 %s1818, 0
          %s1821 = sshll.u32 %s1795, 4
          %s1822 = int_to_ptr.vmem [resolvable:$true] %s1821
          %s1823 = sshll.u32 %s1810, 4
          %s1824 = int_to_ptr.hbm [resolvable:$true] %s1823
          %1830 = sst [smem:[#allocation7]] 1024
          %s1831 = scalar_lea.smem [#allocation7], 1
          %1832 = sst [smem:[%s1831]] 2048
          %s1833 = scalar_lea.smem [#allocation7], 2
          %1834 = sst [smem:[%s1833]] 16
          %s1835 = scalar_lea.smem [#allocation7], 3
          %1836 = sst [smem:[%s1835]] 64
          %s1837 = scalar_lea.smem [#allocation7], 4
          %1838 = sst [smem:[%s1837]] 64
          %s1839 = scalar_lea.smem [#allocation7], 5
          %1840 = sst [smem:[%s1839]] 4
          %1842 = dma.general %s1822, 4096, %s1824, %s1792, [#allocation6], [#allocation7], %s1820, 0
        $region36: #{tpu_custom_call.1} parent=31 // pred_fallthru
          _
        // Predicated region
        $region37: #{tpu_custom_call.1} parent=31 // pred_check
          %p1843 = pneg %p150
        $region38: #{tpu_custom_call.1} parent=31 // pred_check_branch
          %1845 = sbr.rel (%p1843) target = $region40
        $region39: #{tpu_custom_call.1} parent=31 // pred_region
          %1847 = vsyncadd %s1797, 0
          %s1848 = smul.addr %s26, 2
          %s1849 = sadd.s32 %s27, %s1848
          %s1850 = smul.addr %s1849, 2
          %s1851 = scalar_lea.hbm %s4, %s1850
          %s1853 = sshll.u32 %s1800, 4
          %s1854 = int_to_ptr.vmem [resolvable:$true] %s1853
          %s1855 = sshll.u32 %s1851, 4
          %s1856 = int_to_ptr.hbm [resolvable:$true] %s1855
          %1858 = dma.vmem_to_hbm [thread:$0]  %s1854, 32, %s1856, %s1797
        $region40: #{tpu_custom_call.1} parent=31 // pred_fallthru
          _
      $region32: #{tpu_custom_call.1} parent=5 // pred_fallthru
        _
      %p1859 = scmp.le.s32.totalorder 2, %s17
      // Predicated region
      $region41: #{tpu_custom_call.1} parent=5 // pred_check
        %p1860 = pneg %p1859
      $region42: #{tpu_custom_call.1} parent=5 // pred_check_branch
        %1862 = sbr.rel (%p1860) target = $region44
      $region43: #{tpu_custom_call.1} parent=5 // pred_region
        %s1863 = ssub.s32 %s17, 2
        // Predicated region
        $region45: #{tpu_custom_call.1} parent=43 // pred_check
          %p1864 = pneg %p128
        $region46: #{tpu_custom_call.1} parent=43 // pred_check_branch
          %1866 = sbr.rel (%p1864) target = $region48
        $region47: #{tpu_custom_call.1} parent=43 // pred_region
          %s1867 = sand.u32 %s113, 1
          %s1868 = scalar_lea.sflag [#allocation3], %s1867
          %s1869 = sand.u32 %s113, 1
          %s1870 = smul.addr %s1869, 256
          %s1871 = scalar_lea.vmem [#allocation2], %s1870
          %1873 = dma.done %s1868, 4096
        $region48: #{tpu_custom_call.1} parent=43 // pred_fallthru
          _
        // Predicated region
        $region49: #{tpu_custom_call.1} parent=43 // pred_check
          %p1874 = pneg %p156
        $region50: #{tpu_custom_call.1} parent=43 // pred_check_branch
          %1876 = sbr.rel (%p1874) target = $region52
        $region51: #{tpu_custom_call.1} parent=43 // pred_region
          %s1877 = sand.u32 %s141, 1
          %s1878 = scalar_lea.sflag [#allocation5], %s1877
          %s1879 = sand.u32 %s141, 1
          %s1880 = smul.addr %s1879, 2
          %s1881 = scalar_lea.vmem [#allocation4], %s1880
          %1883 = dma.done %s1878, 32
        $region52: #{tpu_custom_call.1} parent=43 // pred_fallthru
          _
      $region44: #{tpu_custom_call.1} parent=5 // pred_fallthru
        _
    $region6: #{tpu_custom_call.1} parent=1 // loop_footer
      %s21 = sadd.s32 1, %s17
    $region7: #{tpu_custom_call.1} parent=1 // loop_footer_branch
      %16 = sbr.rel target = $region3
    $region8: #{tpu_custom_call.1} parent=1 // loop_exit
      _
    %1884 = vsyncpa [#allocation3], 1
    %s1885 = scalar_lea.sflag [#allocation3], 1
    %1886 = vsyncpa %s1885, 1
    %1887 = vsyncpa [#allocation5], 1
    %s1888 = scalar_lea.sflag [#allocation5], 1
    %1889 = vsyncpa %s1888, 1

</llo_original>
